<compile_context>
chip_gen: v6e
topology: v6e:2x2x1
jax: 0.10.0
libtpu: 0.0.40
codegen_flags: <defaults>
</compile_context>

<pallas_src>
import numpy as np

import jax
import jax.numpy as jnp
from jax.experimental import pallas as pl
from jax.experimental.pallas import tpu as pltpu


# --------------------------------------------------------------------------
# Fused Pallas kernel: conv stack -> pool -> ctx -> coupling flow
# One grid step == one batch element.
# --------------------------------------------------------------------------
def _fused_forward_kernel(x_ref, th_ref,
                          w_emb_ref, b_emb_ref,
                          w_r1_ref, b_r1_ref,
                          w_r2_ref, b_r2_ref,
                          w_ctx_ref, b_ctx_ref,
                          f_w1a_ref, f_w1c_ref, f_b1_ref,
                          f_ws_ref, f_bs_ref, f_wt_ref, f_bt_ref,
                          z_ref, ld_ref,
                          xpad_ref, epad_ref, h1pad_ref):
    L = x_ref.shape[1]                  # spatial length
    K = w_emb_ref.shape[0]              # conv kernel width
    pad = (K - 1) // 2
    d1 = f_w1a_ref.shape[1]             # coupling split size (d1 == d2)
    n_layers = f_w1a_ref.shape[0]

    def conv_same(src_pad_ref, w_ref, b_ref):
        # 'same' Conv1d as K shifted matmuls on the zero-padded VMEM buffer.
        cout = w_ref.shape[2]
        acc = jnp.zeros((L, cout), jnp.float32)
        for k in range(K):                                   # static unroll
            acc = acc + jnp.dot(src_pad_ref[k:k + L, :], w_ref[k],
                                preferred_element_type=jnp.float32)
        return acc + b_ref[...]                              # (L, cout)

    # ---- embedding conv + ReLU (channels-last, VMEM resident) -------------
    xpad_ref[...] = jnp.zeros_like(xpad_ref)
    xpad_ref[pad:pad + L, :] = x_ref[0]
    e = jnp.maximum(conv_same(xpad_ref, w_emb_ref, b_emb_ref), 0.0)

    # ---- residual block: conv1 + ReLU --------------------------------------
    epad_ref[...] = jnp.zeros_like(epad_ref)
    epad_ref[pad:pad + L, :] = e
    h1 = jnp.maximum(conv_same(epad_ref, w_r1_ref, b_r1_ref), 0.0)

    # ---- residual block: conv2 + residual add + ReLU ------------------------
    h1pad_ref[...] = jnp.zeros_like(h1pad_ref)
    h1pad_ref[pad:pad + L, :] = h1
    h2 = jnp.maximum(conv_same(h1pad_ref, w_r2_ref, b_r2_ref) + e, 0.0)

    # ---- fused global mean pool + context projection ------------------------
    pooled = jnp.sum(h2, axis=0, keepdims=True) * (1.0 / L)          # (1, H)
    ctx = jnp.dot(pooled, w_ctx_ref[...],
                  preferred_element_type=jnp.float32) + b_ctx_ref[...]

    # ---- flow: coupling layers (reverse permutation folded into weights) ----
    # th is the per-half-flipped theta (done once in the wrapper); even layers
    # use flip-folded weights, odd layers the original ones (see pack_params),
    # so no lane reversals are needed inside the kernel.
    th = th_ref[0]                              # (1, D)
    p = th[:, :d1]                              # conditioner input / kept half
    q = th[:, d1:]                              # transformed half
    ld = jnp.zeros((1, 1), jnp.float32)
    for i in range(n_layers):                   # static unroll (n_layers = 2)
        h = jnp.dot(p, f_w1a_ref[i], preferred_element_type=jnp.float32)
        h = h + jnp.dot(ctx, f_w1c_ref[i], preferred_element_type=jnp.float32)
        h = jnp.maximum(h + f_b1_ref[i], 0.0)
        s = jnp.tanh(jnp.dot(h, f_ws_ref[i],
                             preferred_element_type=jnp.float32) + f_bs_ref[i])
        t = jnp.dot(h, f_wt_ref[i],
                    preferred_element_type=jnp.float32) + f_bt_ref[i]
        y = q * jnp.exp(s) + t
        ld = ld + jnp.sum(s, axis=-1, keepdims=True)
        q = p
        p = y

    z_ref[0] = jnp.concatenate([q, p], axis=-1)     # (1, D)
    ld_ref[0] = ld                                  # (1, 1)


# --------------------------------------------------------------------------
# Parameter packing (done ONCE, outside the per-call path)
# --------------------------------------------------------------------------
def pack_params(params):
    """Pack/pre-process weights for the fused kernel.

    * Conv weights (C_out, C_in, K) -> (K, C_in, C_out) so the conv becomes K
      shifted channels-last matmuls.
    * Biases pre-shaped to (1, C) / (n, 1, C).
    * The flow's inter-layer reverse permutation `z[:, ::-1]` is folded into
      the weights of the EVEN coupling layers (row-flip of w1a, column-flip of
      ws/wt, flip of bs/bt); odd layers stay untouched.  Requires an even
      number of layers and d1 == d2 (theta_dim even).
    """
    n_flow = len(params["flow"])
    assert n_flow % 2 == 0, "flip-folding implemented for an even layer count"
    # TODO(synk): odd layer counts would need one final per-half flip of z.

    def conv_stack(w):                     # (Cout, Cin, K) -> (K, Cin, Cout)
        return jnp.transpose(w, (2, 1, 0))

    packed = {
        "w_emb": conv_stack(params["emb_w"]), "b_emb": params["emb_b"].reshape(1, -1),
        "w_r1": conv_stack(params["res_w1"]), "b_r1": params["res_b1"].reshape(1, -1),
        "w_r2": conv_stack(params["res_w2"]), "b_r2": params["res_b2"].reshape(1, -1),
        "w_ctx": params["ctx_w"],             "b_ctx": params["ctx_b"].reshape(1, -1),
    }

    w1a, w1c, b1, ws, bs, wt, bt = [], [], [], [], [], [], []
    for i, layer in enumerate(params["flow"]):
        if i % 2 == 0:   # fold the reverse permutation into this layer
            w1a.append(layer["w1a"][::-1, :])
            ws.append(layer["ws"][:, ::-1]);  bs.append(layer["bs"][::-1])
            wt.append(layer["wt"][:, ::-1]);  bt.append(layer["bt"][::-1])
        else:
            w1a.append(layer["w1a"])
            ws.append(layer["ws"]);           bs.append(layer["bs"])
            wt.append(layer["wt"]);           bt.append(layer["bt"])
        w1c.append(layer["w1c"])
        b1.append(layer["b1"])

    packed["f_w1a"] = jnp.stack(w1a)                 # (n, d1, hidden)
    packed["f_w1c"] = jnp.stack(w1c)                 # (n, ctx, hidden)
    packed["f_b1"] = jnp.stack(b1)[:, None, :]       # (n, 1, hidden)
    packed["f_ws"] = jnp.stack(ws)                   # (n, hidden, d2)
    packed["f_bs"] = jnp.stack(bs)[:, None, :]       # (n, 1, d2)
    packed["f_wt"] = jnp.stack(wt)                   # (n, hidden, d2)
    packed["f_bt"] = jnp.stack(bt)[:, None, :]       # (n, 1, d2)
    return packed


_WEIGHT_ORDER = ("w_emb", "b_emb", "w_r1", "b_r1", "w_r2", "b_r2",
                 "w_ctx", "b_ctx",
                 "f_w1a", "f_w1c", "f_b1", "f_ws", "f_bs", "f_wt", "f_bt")


# --------------------------------------------------------------------------
# Wrapper: single pallas_call over a batch-parallel grid
# --------------------------------------------------------------------------
def glas_forward(packed, theta, x):
    B, C_in, L = x.shape
    D = theta.shape[1]
    assert D % 2 == 0, "theta_dim must be even (d1 == d2)"
    d1 = D // 2
    K, _, H = packed["w_emb"].shape
    pad = (K - 1) // 2
    Lp = L + 2 * pad

    # One-time per-call layout plumbing (tiny): NCW -> NLC, flip each theta
    # half (the matching weight flips were folded at pack time).
    x_cl = jnp.transpose(x, (0, 2, 1))                            # (B, L, C_in)
    perm = np.concatenate([np.arange(d1)[::-1], np.arange(d1, D)[::-1]])
    th = theta[:, perm][:, None, :]                               # (B, 1, D)

    weights = [packed[name] for name in _WEIGHT_ORDER]

    def full_spec(arr):
        nd = arr.ndim
        return pl.BlockSpec(arr.shape, lambda b, _n=nd: (0,) * _n)

    grid_spec = pltpu.PrefetchScalarGridSpec(
        num_scalar_prefetch=0,
        grid=(B,),
        in_specs=[pl.BlockSpec((1, L, C_in), lambda b: (b, 0, 0)),
                  pl.BlockSpec((1, 1, D), lambda b: (b, 0, 0))]
                 + [full_spec(w) for w in weights],
        out_specs=[pl.BlockSpec((1, 1, D), lambda b: (b, 0, 0)),
                   pl.BlockSpec((1, 1, 1), lambda b: (b, 0, 0))],
        scratch_shapes=[pltpu.VMEM((Lp, C_in), jnp.float32),   # padded input
                        pltpu.VMEM((Lp, H), jnp.float32),      # padded embedding
                        pltpu.VMEM((Lp, H), jnp.float32)])     # padded h1

    z3, ld3 = pl.pallas_call(
        _fused_forward_kernel,
        out_shape=(jax.ShapeDtypeStruct((B, 1, D), jnp.float32),
                   jax.ShapeDtypeStruct((B, 1, 1), jnp.float32)),
        grid_spec=grid_spec,
        compiler_params=pltpu.CompilerParams(
            dimension_semantics=("parallel",)),      # 2 TCs on v7x split batch
    )(x_cl, th, *weights)

    return z3[:, 0, :], ld3[:, 0, 0]


# --------------------------------------------------------------------------
# Pure-JAX reference (im2col conv, explicit flow loop with z[:, ::-1])
# --------------------------------------------------------------------------
def _conv1d_ref(x, w, b, *, relu, residual=None):
    B, C, L = x.shape
    Cout, Cin, K = w.shape
    pad = (K - 1) // 2
    xp = jnp.pad(x, ((0, 0), (0, 0), (pad, pad)))
    cols = jnp.stack([xp[:, :, k:k + L] for k in range(K)], axis=-1)   # (B,C,L,K)
    patches = cols.transpose(0, 2, 1, 3).reshape(B * L, C * K)
    y = patches @ w.reshape(Cout, Cin * K).T + b[None, :]
    if residual is not None:
        y = y + residual.transpose(0, 2, 1).reshape(B * L, Cout)
    if relu:
        y = jnp.maximum(y, 0.0)
    return y.reshape(B, L, Cout).transpose(0, 2, 1)


def forward_ref(params, theta, x):
    e = _conv1d_ref(x, params["emb_w"], params["emb_b"], relu=True)
    h1 = _conv1d_ref(e, params["res_w1"], params["res_b1"], relu=True)
    h2 = _conv1d_ref(h1, params["res_w2"], params["res_b2"], relu=True, residual=e)
    pooled = jnp.mean(h2, axis=-1)                                   # (B, H)
    ctx = pooled @ params["ctx_w"] + params["ctx_b"][None, :]

    B, D = theta.shape
    d1 = D // 2
    z = theta
    logabsdet = jnp.zeros((B,), jnp.float32)
    n_layers = len(params["flow"])
    for i, layer in enumerate(params["flow"]):
        x1, x2 = z[:, :d1], z[:, d1:]
        h = jnp.maximum(x1 @ layer["w1a"] + ctx @ layer["w1c"]
                        + layer["b1"][None, :], 0.0)
        s = jnp.tanh(h @ layer["ws"] + layer["bs"][None, :])
        t = h @ layer["wt"] + layer["bt"][None, :]
        y2 = x2 * jnp.exp(s) + t
        z = jnp.concatenate([x1, y2], axis=-1)
        logabsdet = logabsdet + jnp.sum(s, axis=-1)
        if i != n_layers - 1:
            z = z[:, ::-1]                       # reverse permutation
    return z, logabsdet


# --------------------------------------------------------------------------
# Deterministic parameter init
# --------------------------------------------------------------------------
def init_params(key, c_in=4, emb_ch=32, ctx_dim=8, theta_dim=4, hidden=32, k=3,
                n_flow_layers=2):
    keys = jax.random.split(key, 32)
    ki = iter(range(32))

    def w(shape, fan_in):
        return (jax.random.normal(keys[next(ki)], shape, jnp.float32)
                / jnp.sqrt(jnp.float32(fan_in)))

    d1 = theta_dim // 2
    d2 = theta_dim - d1
    params = {
        "emb_w": w((emb_ch, c_in, k), c_in * k),
        "emb_b": w((emb_ch,), 1.0) * 0.1,
        "res_w1": w((emb_ch, emb_ch, k), emb_ch * k),
        "res_b1": w((emb_ch,), 1.0) * 0.1,
        "res_w2": w((emb_ch, emb_ch, k), emb_ch * k),
        "res_b2": w((emb_ch,), 1.0) * 0.1,
        "ctx_w": w((emb_ch, ctx_dim), emb_ch),
        "ctx_b": w((ctx_dim,), 1.0) * 0.1,
        "flow": [],
    }
    for _ in range(n_flow_layers):
        params["flow"].append({
            "w1a": w((d1, hidden), d1),
            "w1c": w((ctx_dim, hidden), ctx_dim),
            "b1": w((hidden,), 1.0) * 0.1,
            "ws": w((hidden, d2), hidden),
            "bs": w((d2,), 1.0) * 0.1,
            "wt": w((hidden, d2), hidden),
            "bt": w((d2,), 1.0) * 0.1,
        })
    return params


# --------------------------------------------------------------------------
if __name__ == "__main__":
    root = jax.random.PRNGKey(0)
    kp, kx, kt = jax.random.split(root, 3)

    B, C_IN, L, D_THETA = 2, 4, 16, 4
    params = init_params(kp, c_in=C_IN, theta_dim=D_THETA)
    packed = pack_params(params)          # one-time weight packing / flip-fold

    x = jax.random.normal(kx, (B, C_IN, L), jnp.float32)      # (B, C, L) NCW
    theta = jax.random.normal(kt, (B, D_THETA), jnp.float32)

    fwd = jax.jit(glas_forward)
    z, logabsdet = fwd(packed, theta, x)
    jax.block_until_ready((z, logabsdet))

    z_ref, ld_ref = forward_ref(params, theta, x)
    assert z.shape == (B, D_THETA) and logabsdet.shape == (B,)
    assert jnp.allclose(z, z_ref, atol=1e-4, rtol=1e-4)
    assert jnp.allclose(logabsdet, ld_ref, atol=1e-4, rtol=1e-4)

    print("KERNEL_OK")
</pallas_src>

<mosaic_0001>
module attributes {stable_mosaic.version = 11 : i64} {
  func.func @_fused_forward_kernel(%arg0: i32, %arg1: memref<1x16x4xf32, #tpu.memory_space<vmem>>, %arg2: memref<1x1x4xf32, #tpu.memory_space<vmem>>, %arg3: memref<3x4x32xf32, #tpu.memory_space<vmem>>, %arg4: memref<1x32xf32, #tpu.memory_space<vmem>>, %arg5: memref<3x32x32xf32, #tpu.memory_space<vmem>>, %arg6: memref<1x32xf32, #tpu.memory_space<vmem>>, %arg7: memref<3x32x32xf32, #tpu.memory_space<vmem>>, %arg8: memref<1x32xf32, #tpu.memory_space<vmem>>, %arg9: memref<32x8xf32, #tpu.memory_space<vmem>>, %arg10: memref<1x8xf32, #tpu.memory_space<vmem>>, %arg11: memref<2x2x32xf32, #tpu.memory_space<vmem>>, %arg12: memref<2x8x32xf32, #tpu.memory_space<vmem>>, %arg13: memref<2x1x32xf32, #tpu.memory_space<vmem>>, %arg14: memref<2x32x2xf32, #tpu.memory_space<vmem>>, %arg15: memref<2x1x2xf32, #tpu.memory_space<vmem>>, %arg16: memref<2x32x2xf32, #tpu.memory_space<vmem>>, %arg17: memref<2x1x2xf32, #tpu.memory_space<vmem>>, %arg18: memref<1x1x4xf32, #tpu.memory_space<vmem>>, %arg19: memref<1x1x1xf32, #tpu.memory_space<vmem>>, %arg20: memref<18x4xf32, #tpu.memory_space<vmem>>, %arg21: memref<18x32xf32, #tpu.memory_space<vmem>>, %arg22: memref<18x32xf32, #tpu.memory_space<vmem>>) attributes {dimension_semantics = [#tpu.dimension_semantics<parallel>], iteration_bounds = array<i64: 2>, scalar_prefetch = 0 : i64, scratch_operands = 3 : i64, tpu.core_type = #tpu.core_type<tc>, window_params = [{transform_indices = @transform_0, window_bounds = array<i64: 1, 16, 4>}, {transform_indices = @transform_1, window_bounds = array<i64: 1, 1, 4>}, {pipeline_mode = #tpu.pipeline_mode<synchronous>, transform_indices = @transform_2, window_bounds = array<i64: 3, 4, 32>}, {pipeline_mode = #tpu.pipeline_mode<synchronous>, transform_indices = @transform_3, window_bounds = array<i64: 1, 32>}, {pipeline_mode = #tpu.pipeline_mode<synchronous>, transform_indices = @transform_4, window_bounds = array<i64: 3, 32, 32>}, {pipeline_mode = #tpu.pipeline_mode<synchronous>, transform_indices = @transform_5, window_bounds = array<i64: 1, 32>}, {pipeline_mode = #tpu.pipeline_mode<synchronous>, transform_indices = @transform_6, window_bounds = array<i64: 3, 32, 32>}, {pipeline_mode = #tpu.pipeline_mode<synchronous>, transform_indices = @transform_7, window_bounds = array<i64: 1, 32>}, {pipeline_mode = #tpu.pipeline_mode<synchronous>, transform_indices = @transform_8, window_bounds = array<i64: 32, 8>}, {pipeline_mode = #tpu.pipeline_mode<synchronous>, transform_indices = @transform_9, window_bounds = array<i64: 1, 8>}, {pipeline_mode = #tpu.pipeline_mode<synchronous>, transform_indices = @transform_10, window_bounds = array<i64: 2, 2, 32>}, {pipeline_mode = #tpu.pipeline_mode<synchronous>, transform_indices = @transform_11, window_bounds = array<i64: 2, 8, 32>}, {pipeline_mode = #tpu.pipeline_mode<synchronous>, transform_indices = @transform_12, window_bounds = array<i64: 2, 1, 32>}, {pipeline_mode = #tpu.pipeline_mode<synchronous>, transform_indices = @transform_13, window_bounds = array<i64: 2, 32, 2>}, {pipeline_mode = #tpu.pipeline_mode<synchronous>, transform_indices = @transform_14, window_bounds = array<i64: 2, 1, 2>}, {pipeline_mode = #tpu.pipeline_mode<synchronous>, transform_indices = @transform_15, window_bounds = array<i64: 2, 32, 2>}, {pipeline_mode = #tpu.pipeline_mode<synchronous>, transform_indices = @transform_16, window_bounds = array<i64: 2, 1, 2>}, {transform_indices = @transform_17, window_bounds = array<i64: 1, 1, 4>}, {transform_indices = @transform_18, window_bounds = array<i64: 1, 1, 1>}]} {
    %cst = arith.constant 0.000000e+00 : f32
    %0 = vector.broadcast %cst : f32 to vector<18x4xf32>
    %c0 = arith.constant 0 : index
    %c0_0 = arith.constant 0 : index
    %1 = vector.load %arg20[%c0, %c0_0] : memref<18x4xf32, #tpu.memory_space<vmem>>, vector<18x4xf32>
    tpu.vector_store %arg20[%c0, %c0_0], %0 {strides = array<i32>} : memref<18x4xf32, #tpu.memory_space<vmem>>, vector<18x4xf32>,
    %c0_1 = arith.constant 0 : index
    %c0_2 = arith.constant 0 : index
    %c0_3 = arith.constant 0 : index
    %2 = vector.load %arg1[%c0_1, %c0_2, %c0_3] : memref<1x16x4xf32, #tpu.memory_space<vmem>>, vector<1x16x4xf32>
    %3 = vector.shape_cast %2 : vector<1x16x4xf32> to vector<16x4xf32>
    %c1 = arith.constant 1 : index
    %c0_4 = arith.constant 0 : index
    %4 = vector.load %arg20[%c1, %c0_4] : memref<18x4xf32, #tpu.memory_space<vmem>>, vector<16x4xf32>
    tpu.vector_store %arg20[%c1, %c0_4], %3 {strides = array<i32>} : memref<18x4xf32, #tpu.memory_space<vmem>>, vector<16x4xf32>,
    %cst_5 = arith.constant 0.000000e+00 : f32
    %5 = vector.broadcast %cst_5 : f32 to vector<16x32xf32>
    %c0_6 = arith.constant 0 : index
    %c0_7 = arith.constant 0 : index
    %6 = vector.load %arg20[%c0_6, %c0_7] : memref<18x4xf32, #tpu.memory_space<vmem>>, vector<16x4xf32>
    %c0_8 = arith.constant 0 : index
    %c0_9 = arith.constant 0 : index
    %c0_10 = arith.constant 0 : index
    %7 = vector.load %arg3[%c0_8, %c0_9, %c0_10] : memref<3x4x32xf32, #tpu.memory_space<vmem>>, vector<1x4x32xf32>
    %8 = vector.shape_cast %7 : vector<1x4x32xf32> to vector<4x32xf32>
    %cst_11 = arith.constant dense<0.000000e+00> : vector<16x32xf32>
    %9 = tpu.matmul %6, %8, %cst_11 {dimension_numbers = #tpu.dot_dimension_numbers<[1], [0], [0], [1], [0, 0, 1, 1], [], []>} : vector<16x4xf32>, vector<4x32xf32>, vector<16x32xf32> -> vector<16x32xf32>
    %10 = arith.addf %5, %9 : vector<16x32xf32>
    %c1_12 = arith.constant 1 : index
    %c0_13 = arith.constant 0 : index
    %11 = vector.load %arg20[%c1_12, %c0_13] : memref<18x4xf32, #tpu.memory_space<vmem>>, vector<16x4xf32>
    %c1_14 = arith.constant 1 : index
    %c0_15 = arith.constant 0 : index
    %c0_16 = arith.constant 0 : index
    %12 = vector.load %arg3[%c1_14, %c0_15, %c0_16] : memref<3x4x32xf32, #tpu.memory_space<vmem>>, vector<1x4x32xf32>
    %13 = vector.shape_cast %12 : vector<1x4x32xf32> to vector<4x32xf32>
    %cst_17 = arith.constant dense<0.000000e+00> : vector<16x32xf32>
    %14 = tpu.matmul %11, %13, %cst_17 {dimension_numbers = #tpu.dot_dimension_numbers<[1], [0], [0], [1], [0, 0, 1, 1], [], []>} : vector<16x4xf32>, vector<4x32xf32>, vector<16x32xf32> -> vector<16x32xf32>
    %15 = arith.addf %10, %14 : vector<16x32xf32>
    %c2 = arith.constant 2 : index
    %c0_18 = arith.constant 0 : index
    %16 = vector.load %arg20[%c2, %c0_18] : memref<18x4xf32, #tpu.memory_space<vmem>>, vector<16x4xf32>
    %c2_19 = arith.constant 2 : index
    %c0_20 = arith.constant 0 : index
    %c0_21 = arith.constant 0 : index
    %17 = vector.load %arg3[%c2_19, %c0_20, %c0_21] : memref<3x4x32xf32, #tpu.memory_space<vmem>>, vector<1x4x32xf32>
    %18 = vector.shape_cast %17 : vector<1x4x32xf32> to vector<4x32xf32>
    %cst_22 = arith.constant dense<0.000000e+00> : vector<16x32xf32>
    %19 = tpu.matmul %16, %18, %cst_22 {dimension_numbers = #tpu.dot_dimension_numbers<[1], [0], [0], [1], [0, 0, 1, 1], [], []>} : vector<16x4xf32>, vector<4x32xf32>, vector<16x32xf32> -> vector<16x32xf32>
    %20 = arith.addf %15, %19 : vector<16x32xf32>
    %c0_23 = arith.constant 0 : index
    %c0_24 = arith.constant 0 : index
    %21 = vector.load %arg4[%c0_23, %c0_24] : memref<1x32xf32, #tpu.memory_space<vmem>>, vector<1x32xf32>
    %22 = vector.broadcast %21 : vector<1x32xf32> to vector<16x32xf32>
    %23 = arith.addf %20, %22 : vector<16x32xf32>
    %cst_25 = arith.constant 0.000000e+00 : f32
    %24 = vector.broadcast %cst_25 : f32 to vector<16x32xf32>
    %25 = arith.maximumf %23, %24 : vector<16x32xf32>
    %cst_26 = arith.constant 0.000000e+00 : f32
    %26 = vector.broadcast %cst_26 : f32 to vector<18x32xf32>
    %c0_27 = arith.constant 0 : index
    %c0_28 = arith.constant 0 : index
    %27 = vector.load %arg21[%c0_27, %c0_28] : memref<18x32xf32, #tpu.memory_space<vmem>>, vector<18x32xf32>
    tpu.vector_store %arg21[%c0_27, %c0_28], %26 {strides = array<i32>} : memref<18x32xf32, #tpu.memory_space<vmem>>, vector<18x32xf32>,
    %c1_29 = arith.constant 1 : index
    %c0_30 = arith.constant 0 : index
    %28 = vector.load %arg21[%c1_29, %c0_30] : memref<18x32xf32, #tpu.memory_space<vmem>>, vector<16x32xf32>
    tpu.vector_store %arg21[%c1_29, %c0_30], %25 {strides = array<i32>} : memref<18x32xf32, #tpu.memory_space<vmem>>, vector<16x32xf32>,
    %cst_31 = arith.constant 0.000000e+00 : f32
    %29 = vector.broadcast %cst_31 : f32 to vector<16x32xf32>
    %c0_32 = arith.constant 0 : index
    %c0_33 = arith.constant 0 : index
    %30 = vector.load %arg21[%c0_32, %c0_33] : memref<18x32xf32, #tpu.memory_space<vmem>>, vector<16x32xf32>
    %c0_34 = arith.constant 0 : index
    %c0_35 = arith.constant 0 : index
    %c0_36 = arith.constant 0 : index
    %31 = vector.load %arg5[%c0_34, %c0_35, %c0_36] : memref<3x32x32xf32, #tpu.memory_space<vmem>>, vector<1x32x32xf32>
    %32 = vector.shape_cast %31 : vector<1x32x32xf32> to vector<32x32xf32>
    %cst_37 = arith.constant dense<0.000000e+00> : vector<16x32xf32>
    %33 = tpu.matmul %30, %32, %cst_37 {dimension_numbers = #tpu.dot_dimension_numbers<[1], [0], [0], [1], [0, 0, 1, 1], [], []>} : vector<16x32xf32>, vector<32x32xf32>, vector<16x32xf32> -> vector<16x32xf32>
    %34 = arith.addf %29, %33 : vector<16x32xf32>
    %c1_38 = arith.constant 1 : index
    %c0_39 = arith.constant 0 : index
    %35 = vector.load %arg21[%c1_38, %c0_39] : memref<18x32xf32, #tpu.memory_space<vmem>>, vector<16x32xf32>
    %c1_40 = arith.constant 1 : index
    %c0_41 = arith.constant 0 : index
    %c0_42 = arith.constant 0 : index
    %36 = vector.load %arg5[%c1_40, %c0_41, %c0_42] : memref<3x32x32xf32, #tpu.memory_space<vmem>>, vector<1x32x32xf32>
    %37 = vector.shape_cast %36 : vector<1x32x32xf32> to vector<32x32xf32>
    %cst_43 = arith.constant dense<0.000000e+00> : vector<16x32xf32>
    %38 = tpu.matmul %35, %37, %cst_43 {dimension_numbers = #tpu.dot_dimension_numbers<[1], [0], [0], [1], [0, 0, 1, 1], [], []>} : vector<16x32xf32>, vector<32x32xf32>, vector<16x32xf32> -> vector<16x32xf32>
    %39 = arith.addf %34, %38 : vector<16x32xf32>
    %c2_44 = arith.constant 2 : index
    %c0_45 = arith.constant 0 : index
    %40 = vector.load %arg21[%c2_44, %c0_45] : memref<18x32xf32, #tpu.memory_space<vmem>>, vector<16x32xf32>
    %c2_46 = arith.constant 2 : index
    %c0_47 = arith.constant 0 : index
    %c0_48 = arith.constant 0 : index
    %41 = vector.load %arg5[%c2_46, %c0_47, %c0_48] : memref<3x32x32xf32, #tpu.memory_space<vmem>>, vector<1x32x32xf32>
    %42 = vector.shape_cast %41 : vector<1x32x32xf32> to vector<32x32xf32>
    %cst_49 = arith.constant dense<0.000000e+00> : vector<16x32xf32>
    %43 = tpu.matmul %40, %42, %cst_49 {dimension_numbers = #tpu.dot_dimension_numbers<[1], [0], [0], [1], [0, 0, 1, 1], [], []>} : vector<16x32xf32>, vector<32x32xf32>, vector<16x32xf32> -> vector<16x32xf32>
    %44 = arith.addf %39, %43 : vector<16x32xf32>
    %c0_50 = arith.constant 0 : index
    %c0_51 = arith.constant 0 : index
    %45 = vector.load %arg6[%c0_50, %c0_51] : memref<1x32xf32, #tpu.memory_space<vmem>>, vector<1x32xf32>
    %46 = vector.broadcast %45 : vector<1x32xf32> to vector<16x32xf32>
    %47 = arith.addf %44, %46 : vector<16x32xf32>
    %cst_52 = arith.constant 0.000000e+00 : f32
    %48 = vector.broadcast %cst_52 : f32 to vector<16x32xf32>
    %49 = arith.maximumf %47, %48 : vector<16x32xf32>
    %cst_53 = arith.constant 0.000000e+00 : f32
    %50 = vector.broadcast %cst_53 : f32 to vector<18x32xf32>
    %c0_54 = arith.constant 0 : index
    %c0_55 = arith.constant 0 : index
    %51 = vector.load %arg22[%c0_54, %c0_55] : memref<18x32xf32, #tpu.memory_space<vmem>>, vector<18x32xf32>
    tpu.vector_store %arg22[%c0_54, %c0_55], %50 {strides = array<i32>} : memref<18x32xf32, #tpu.memory_space<vmem>>, vector<18x32xf32>,
    %c1_56 = arith.constant 1 : index
    %c0_57 = arith.constant 0 : index
    %52 = vector.load %arg22[%c1_56, %c0_57] : memref<18x32xf32, #tpu.memory_space<vmem>>, vector<16x32xf32>
    tpu.vector_store %arg22[%c1_56, %c0_57], %49 {strides = array<i32>} : memref<18x32xf32, #tpu.memory_space<vmem>>, vector<16x32xf32>,
    %cst_58 = arith.constant 0.000000e+00 : f32
    %53 = vector.broadcast %cst_58 : f32 to vector<16x32xf32>
    %c0_59 = arith.constant 0 : index
    %c0_60 = arith.constant 0 : index
    %54 = vector.load %arg22[%c0_59, %c0_60] : memref<18x32xf32, #tpu.memory_space<vmem>>, vector<16x32xf32>
    %c0_61 = arith.constant 0 : index
    %c0_62 = arith.constant 0 : index
    %c0_63 = arith.constant 0 : index
    %55 = vector.load %arg7[%c0_61, %c0_62, %c0_63] : memref<3x32x32xf32, #tpu.memory_space<vmem>>, vector<1x32x32xf32>
    %56 = vector.shape_cast %55 : vector<1x32x32xf32> to vector<32x32xf32>
    %cst_64 = arith.constant dense<0.000000e+00> : vector<16x32xf32>
    %57 = tpu.matmul %54, %56, %cst_64 {dimension_numbers = #tpu.dot_dimension_numbers<[1], [0], [0], [1], [0, 0, 1, 1], [], []>} : vector<16x32xf32>, vector<32x32xf32>, vector<16x32xf32> -> vector<16x32xf32>
    %58 = arith.addf %53, %57 : vector<16x32xf32>
    %c1_65 = arith.constant 1 : index
    %c0_66 = arith.constant 0 : index
    %59 = vector.load %arg22[%c1_65, %c0_66] : memref<18x32xf32, #tpu.memory_space<vmem>>, vector<16x32xf32>
    %c1_67 = arith.constant 1 : index
    %c0_68 = arith.constant 0 : index
    %c0_69 = arith.constant 0 : index
    %60 = vector.load %arg7[%c1_67, %c0_68, %c0_69] : memref<3x32x32xf32, #tpu.memory_space<vmem>>, vector<1x32x32xf32>
    %61 = vector.shape_cast %60 : vector<1x32x32xf32> to vector<32x32xf32>
    %cst_70 = arith.constant dense<0.000000e+00> : vector<16x32xf32>
    %62 = tpu.matmul %59, %61, %cst_70 {dimension_numbers = #tpu.dot_dimension_numbers<[1], [0], [0], [1], [0, 0, 1, 1], [], []>} : vector<16x32xf32>, vector<32x32xf32>, vector<16x32xf32> -> vector<16x32xf32>
    %63 = arith.addf %58, %62 : vector<16x32xf32>
    %c2_71 = arith.constant 2 : index
    %c0_72 = arith.constant 0 : index
    %64 = vector.load %arg22[%c2_71, %c0_72] : memref<18x32xf32, #tpu.memory_space<vmem>>, vector<16x32xf32>
    %c2_73 = arith.constant 2 : index
    %c0_74 = arith.constant 0 : index
    %c0_75 = arith.constant 0 : index
    %65 = vector.load %arg7[%c2_73, %c0_74, %c0_75] : memref<3x32x32xf32, #tpu.memory_space<vmem>>, vector<1x32x32xf32>
    %66 = vector.shape_cast %65 : vector<1x32x32xf32> to vector<32x32xf32>
    %cst_76 = arith.constant dense<0.000000e+00> : vector<16x32xf32>
    %67 = tpu.matmul %64, %66, %cst_76 {dimension_numbers = #tpu.dot_dimension_numbers<[1], [0], [0], [1], [0, 0, 1, 1], [], []>} : vector<16x32xf32>, vector<32x32xf32>, vector<16x32xf32> -> vector<16x32xf32>
    %68 = arith.addf %63, %67 : vector<16x32xf32>
    %c0_77 = arith.constant 0 : index
    %c0_78 = arith.constant 0 : index
    %69 = vector.load %arg8[%c0_77, %c0_78] : memref<1x32xf32, #tpu.memory_space<vmem>>, vector<1x32xf32>
    %70 = vector.broadcast %69 : vector<1x32xf32> to vector<16x32xf32>
    %71 = arith.addf %68, %70 : vector<16x32xf32>
    %72 = arith.addf %71, %25 : vector<16x32xf32>
    %cst_79 = arith.constant 0.000000e+00 : f32
    %73 = vector.broadcast %cst_79 : f32 to vector<16x32xf32>
    %74 = arith.maximumf %72, %73 : vector<16x32xf32>
    %cst_80 = arith.constant dense<0.000000e+00> : vector<32xf32>
    %75 = vector.multi_reduction <add>, %74, %cst_80 [0] : vector<16x32xf32> to vector<32xf32>
    %76 = vector.shape_cast %75 : vector<32xf32> to vector<1x32xf32>
    %cst_81 = arith.constant 6.250000e-02 : f32
    %77 = vector.broadcast %cst_81 : f32 to vector<1x32xf32>
    %78 = arith.mulf %76, %77 : vector<1x32xf32>
    %c0_82 = arith.constant 0 : index
    %c0_83 = arith.constant 0 : index
    %79 = vector.load %arg9[%c0_82, %c0_83] : memref<32x8xf32, #tpu.memory_space<vmem>>, vector<32x8xf32>
    %cst_84 = arith.constant dense<0.000000e+00> : vector<1x8xf32>
    %80 = tpu.matmul %78, %79, %cst_84 {dimension_numbers = #tpu.dot_dimension_numbers<[1], [0], [0], [1], [0, 0, 1, 1], [], []>} : vector<1x32xf32>, vector<32x8xf32>, vector<1x8xf32> -> vector<1x8xf32>
    %c0_85 = arith.constant 0 : index
    %c0_86 = arith.constant 0 : index
    %81 = vector.load %arg10[%c0_85, %c0_86] : memref<1x8xf32, #tpu.memory_space<vmem>>, vector<1x8xf32>
    %82 = arith.addf %80, %81 : vector<1x8xf32>
    %c0_87 = arith.constant 0 : index
    %c0_88 = arith.constant 0 : index
    %c0_89 = arith.constant 0 : index
    %83 = vector.load %arg2[%c0_87, %c0_88, %c0_89] : memref<1x1x4xf32, #tpu.memory_space<vmem>>, vector<1x1x4xf32>
    %84 = vector.shape_cast %83 : vector<1x1x4xf32> to vector<1x4xf32>
    %85 = vector.extract_strided_slice %84 {offsets = [0, 0], sizes = [1, 2], strides = [1, 1]} : vector<1x4xf32> to vector<1x2xf32>
    %86 = vector.extract_strided_slice %84 {offsets = [0, 2], sizes = [1, 2], strides = [1, 1]} : vector<1x4xf32> to vector<1x2xf32>
    %cst_90 = arith.constant 0.000000e+00 : f32
    %87 = vector.broadcast %cst_90 : f32 to vector<1x1xf32>
    %c0_91 = arith.constant 0 : index
    %c0_92 = arith.constant 0 : index
    %c0_93 = arith.constant 0 : index
    %88 = vector.load %arg11[%c0_91, %c0_92, %c0_93] : memref<2x2x32xf32, #tpu.memory_space<vmem>>, vector<1x2x32xf32>
    %89 = vector.shape_cast %88 : vector<1x2x32xf32> to vector<2x32xf32>
    %cst_94 = arith.constant dense<0.000000e+00> : vector<1x32xf32>
    %90 = tpu.matmul %85, %89, %cst_94 {dimension_numbers = #tpu.dot_dimension_numbers<[1], [0], [0], [1], [0, 0, 1, 1], [], []>} : vector<1x2xf32>, vector<2x32xf32>, vector<1x32xf32> -> vector<1x32xf32>
    %c0_95 = arith.constant 0 : index
    %c0_96 = arith.constant 0 : index
    %c0_97 = arith.constant 0 : index
    %91 = vector.load %arg12[%c0_95, %c0_96, %c0_97] : memref<2x8x32xf32, #tpu.memory_space<vmem>>, vector<1x8x32xf32>
    %92 = vector.shape_cast %91 : vector<1x8x32xf32> to vector<8x32xf32>
    %cst_98 = arith.constant dense<0.000000e+00> : vector<1x32xf32>
    %93 = tpu.matmul %82, %92, %cst_98 {dimension_numbers = #tpu.dot_dimension_numbers<[1], [0], [0], [1], [0, 0, 1, 1], [], []>} : vector<1x8xf32>, vector<8x32xf32>, vector<1x32xf32> -> vector<1x32xf32>
    %94 = arith.addf %90, %93 : vector<1x32xf32>
    %c0_99 = arith.constant 0 : index
    %c0_100 = arith.constant 0 : index
    %c0_101 = arith.constant 0 : index
    %95 = vector.load %arg13[%c0_99, %c0_100, %c0_101] : memref<2x1x32xf32, #tpu.memory_space<vmem>>, vector<1x1x32xf32>
    %96 = vector.shape_cast %95 : vector<1x1x32xf32> to vector<1x32xf32>
    %97 = arith.addf %94, %96 : vector<1x32xf32>
    %cst_102 = arith.constant 0.000000e+00 : f32
    %98 = vector.broadcast %cst_102 : f32 to vector<1x32xf32>
    %99 = arith.maximumf %97, %98 : vector<1x32xf32>
    %c0_103 = arith.constant 0 : index
    %c0_104 = arith.constant 0 : index
    %c0_105 = arith.constant 0 : index
    %100 = vector.load %arg14[%c0_103, %c0_104, %c0_105] : memref<2x32x2xf32, #tpu.memory_space<vmem>>, vector<1x32x2xf32>
    %101 = vector.shape_cast %100 : vector<1x32x2xf32> to vector<32x2xf32>
    %cst_106 = arith.constant dense<0.000000e+00> : vector<1x2xf32>
    %102 = tpu.matmul %99, %101, %cst_106 {dimension_numbers = #tpu.dot_dimension_numbers<[1], [0], [0], [1], [0, 0, 1, 1], [], []>} : vector<1x32xf32>, vector<32x2xf32>, vector<1x2xf32> -> vector<1x2xf32>
    %c0_107 = arith.constant 0 : index
    %c0_108 = arith.constant 0 : index
    %c0_109 = arith.constant 0 : index
    %103 = vector.load %arg15[%c0_107, %c0_108, %c0_109] : memref<2x1x2xf32, #tpu.memory_space<vmem>>, vector<1x1x2xf32>
    %104 = vector.shape_cast %103 : vector<1x1x2xf32> to vector<1x2xf32>
    %105 = arith.addf %102, %104 : vector<1x2xf32>
    %106 = math.tanh %105 : vector<1x2xf32>
    %c0_110 = arith.constant 0 : index
    %c0_111 = arith.constant 0 : index
    %c0_112 = arith.constant 0 : index
    %107 = vector.load %arg16[%c0_110, %c0_111, %c0_112] : memref<2x32x2xf32, #tpu.memory_space<vmem>>, vector<1x32x2xf32>
    %108 = vector.shape_cast %107 : vector<1x32x2xf32> to vector<32x2xf32>
    %cst_113 = arith.constant dense<0.000000e+00> : vector<1x2xf32>
    %109 = tpu.matmul %99, %108, %cst_113 {dimension_numbers = #tpu.dot_dimension_numbers<[1], [0], [0], [1], [0, 0, 1, 1], [], []>} : vector<1x32xf32>, vector<32x2xf32>, vector<1x2xf32> -> vector<1x2xf32>
    %c0_114 = arith.constant 0 : index
    %c0_115 = arith.constant 0 : index
    %c0_116 = arith.constant 0 : index
    %110 = vector.load %arg17[%c0_114, %c0_115, %c0_116] : memref<2x1x2xf32, #tpu.memory_space<vmem>>, vector<1x1x2xf32>
    %111 = vector.shape_cast %110 : vector<1x1x2xf32> to vector<1x2xf32>
    %112 = arith.addf %109, %111 : vector<1x2xf32>
    %113 = math.exp %106 : vector<1x2xf32>
    %114 = arith.mulf %86, %113 : vector<1x2xf32>
    %115 = arith.addf %114, %112 : vector<1x2xf32>
    %cst_117 = arith.constant dense<0.000000e+00> : vector<1xf32>
    %116 = vector.multi_reduction <add>, %106, %cst_117 [1] : vector<1x2xf32> to vector<1xf32>
    %117 = vector.shape_cast %116 : vector<1xf32> to vector<1x1xf32>
    %118 = arith.addf %87, %117 : vector<1x1xf32>
    %c1_118 = arith.constant 1 : index
    %c0_119 = arith.constant 0 : index
    %c0_120 = arith.constant 0 : index
    %119 = vector.load %arg11[%c1_118, %c0_119, %c0_120] : memref<2x2x32xf32, #tpu.memory_space<vmem>>, vector<1x2x32xf32>
    %120 = vector.shape_cast %119 : vector<1x2x32xf32> to vector<2x32xf32>
    %cst_121 = arith.constant dense<0.000000e+00> : vector<1x32xf32>
    %121 = tpu.matmul %115, %120, %cst_121 {dimension_numbers = #tpu.dot_dimension_numbers<[1], [0], [0], [1], [0, 0, 1, 1], [], []>} : vector<1x2xf32>, vector<2x32xf32>, vector<1x32xf32> -> vector<1x32xf32>
    %c1_122 = arith.constant 1 : index
    %c0_123 = arith.constant 0 : index
    %c0_124 = arith.constant 0 : index
    %122 = vector.load %arg12[%c1_122, %c0_123, %c0_124] : memref<2x8x32xf32, #tpu.memory_space<vmem>>, vector<1x8x32xf32>
    %123 = vector.shape_cast %122 : vector<1x8x32xf32> to vector<8x32xf32>
    %cst_125 = arith.constant dense<0.000000e+00> : vector<1x32xf32>
    %124 = tpu.matmul %82, %123, %cst_125 {dimension_numbers = #tpu.dot_dimension_numbers<[1], [0], [0], [1], [0, 0, 1, 1], [], []>} : vector<1x8xf32>, vector<8x32xf32>, vector<1x32xf32> -> vector<1x32xf32>
    %125 = arith.addf %121, %124 : vector<1x32xf32>
    %c1_126 = arith.constant 1 : index
    %c0_127 = arith.constant 0 : index
    %c0_128 = arith.constant 0 : index
    %126 = vector.load %arg13[%c1_126, %c0_127, %c0_128] : memref<2x1x32xf32, #tpu.memory_space<vmem>>, vector<1x1x32xf32>
    %127 = vector.shape_cast %126 : vector<1x1x32xf32> to vector<1x32xf32>
    %128 = arith.addf %125, %127 : vector<1x32xf32>
    %cst_129 = arith.constant 0.000000e+00 : f32
    %129 = vector.broadcast %cst_129 : f32 to vector<1x32xf32>
    %130 = arith.maximumf %128, %129 : vector<1x32xf32>
    %c1_130 = arith.constant 1 : index
    %c0_131 = arith.constant 0 : index
    %c0_132 = arith.constant 0 : index
    %131 = vector.load %arg14[%c1_130, %c0_131, %c0_132] : memref<2x32x2xf32, #tpu.memory_space<vmem>>, vector<1x32x2xf32>
    %132 = vector.shape_cast %131 : vector<1x32x2xf32> to vector<32x2xf32>
    %cst_133 = arith.constant dense<0.000000e+00> : vector<1x2xf32>
    %133 = tpu.matmul %130, %132, %cst_133 {dimension_numbers = #tpu.dot_dimension_numbers<[1], [0], [0], [1], [0, 0, 1, 1], [], []>} : vector<1x32xf32>, vector<32x2xf32>, vector<1x2xf32> -> vector<1x2xf32>
    %c1_134 = arith.constant 1 : index
    %c0_135 = arith.constant 0 : index
    %c0_136 = arith.constant 0 : index
    %134 = vector.load %arg15[%c1_134, %c0_135, %c0_136] : memref<2x1x2xf32, #tpu.memory_space<vmem>>, vector<1x1x2xf32>
    %135 = vector.shape_cast %134 : vector<1x1x2xf32> to vector<1x2xf32>
    %136 = arith.addf %133, %135 : vector<1x2xf32>
    %137 = math.tanh %136 : vector<1x2xf32>
    %c1_137 = arith.constant 1 : index
    %c0_138 = arith.constant 0 : index
    %c0_139 = arith.constant 0 : index
    %138 = vector.load %arg16[%c1_137, %c0_138, %c0_139] : memref<2x32x2xf32, #tpu.memory_space<vmem>>, vector<1x32x2xf32>
    %139 = vector.shape_cast %138 : vector<1x32x2xf32> to vector<32x2xf32>
    %cst_140 = arith.constant dense<0.000000e+00> : vector<1x2xf32>
    %140 = tpu.matmul %130, %139, %cst_140 {dimension_numbers = #tpu.dot_dimension_numbers<[1], [0], [0], [1], [0, 0, 1, 1], [], []>} : vector<1x32xf32>, vector<32x2xf32>, vector<1x2xf32> -> vector<1x2xf32>
    %c1_141 = arith.constant 1 : index
    %c0_142 = arith.constant 0 : index
    %c0_143 = arith.constant 0 : index
    %141 = vector.load %arg17[%c1_141, %c0_142, %c0_143] : memref<2x1x2xf32, #tpu.memory_space<vmem>>, vector<1x1x2xf32>
    %142 = vector.shape_cast %141 : vector<1x1x2xf32> to vector<1x2xf32>
    %143 = arith.addf %140, %142 : vector<1x2xf32>
    %144 = math.exp %137 : vector<1x2xf32>
    %145 = arith.mulf %85, %144 : vector<1x2xf32>
    %146 = arith.addf %145, %143 : vector<1x2xf32>
    %cst_144 = arith.constant dense<0.000000e+00> : vector<1xf32>
    %147 = vector.multi_reduction <add>, %137, %cst_144 [1] : vector<1x2xf32> to vector<1xf32>
    %148 = vector.shape_cast %147 : vector<1xf32> to vector<1x1xf32>
    %149 = arith.addf %118, %148 : vector<1x1xf32>
    %150 = tpu.concatenate %115, %146 in 1 : vector<1x2xf32>, vector<1x2xf32> -> vector<1x4xf32>
    %c0_145 = arith.constant 0 : index
    %c0_146 = arith.constant 0 : index
    %c0_147 = arith.constant 0 : index
    %151 = vector.load %arg18[%c0_145, %c0_146, %c0_147] : memref<1x1x4xf32, #tpu.memory_space<vmem>>, vector<1x1x4xf32>
    %152 = vector.shape_cast %151 : vector<1x1x4xf32> to vector<1x4xf32>
    %153 = vector.shape_cast %150 : vector<1x4xf32> to vector<1x1x4xf32>
    tpu.vector_store %arg18[%c0_145, %c0_146, %c0_147], %153 {strides = array<i32>} : memref<1x1x4xf32, #tpu.memory_space<vmem>>, vector<1x1x4xf32>,
    %c0_148 = arith.constant 0 : index
    %c0_149 = arith.constant 0 : index
    %c0_150 = arith.constant 0 : index
    %154 = vector.load %arg19[%c0_148, %c0_149, %c0_150] : memref<1x1x1xf32, #tpu.memory_space<vmem>>, vector<1x1x1xf32>
    %155 = vector.shape_cast %154 : vector<1x1x1xf32> to vector<1x1xf32>
    %156 = vector.shape_cast %149 : vector<1x1xf32> to vector<1x1x1xf32>
    tpu.vector_store %arg19[%c0_148, %c0_149, %c0_150], %156 {strides = array<i32>} : memref<1x1x1xf32, #tpu.memory_space<vmem>>, vector<1x1x1xf32>,
    return
  }
  func.func @transform_0(%arg0: i32) -> (i32, i32, i32) {
    %c0_i32 = arith.constant 0 : i32
    %c0_i32_0 = arith.constant 0 : i32
    %c0_i32_1 = arith.constant 0 : i32
    return %arg0, %c0_i32, %c0_i32_0 : i32, i32, i32
  }
  func.func @transform_1(%arg0: i32) -> (i32, i32, i32) {
    %c0_i32 = arith.constant 0 : i32
    %c0_i32_0 = arith.constant 0 : i32
    %c0_i32_1 = arith.constant 0 : i32
    return %arg0, %c0_i32, %c0_i32_0 : i32, i32, i32
  }
  func.func @transform_2(%arg0: i32) -> (i32, i32, i32) {
    %c0_i32 = arith.constant 0 : i32
    %c0_i32_0 = arith.constant 0 : i32
    %c0_i32_1 = arith.constant 0 : i32
    %c0_i32_2 = arith.constant 0 : i32
    return %c0_i32, %c0_i32_0, %c0_i32_1 : i32, i32, i32
  }
  func.func @transform_3(%arg0: i32) -> (i32, i32) {
    %c0_i32 = arith.constant 0 : i32
    %c0_i32_0 = arith.constant 0 : i32
    %c0_i32_1 = arith.constant 0 : i32
    return %c0_i32, %c0_i32_0 : i32, i32
  }
  func.func @transform_4(%arg0: i32) -> (i32, i32, i32) {
    %c0_i32 = arith.constant 0 : i32
    %c0_i32_0 = arith.constant 0 : i32
    %c0_i32_1 = arith.constant 0 : i32
    %c0_i32_2 = arith.constant 0 : i32
    return %c0_i32, %c0_i32_0, %c0_i32_1 : i32, i32, i32
  }
  func.func @transform_5(%arg0: i32) -> (i32, i32) {
    %c0_i32 = arith.constant 0 : i32
    %c0_i32_0 = arith.constant 0 : i32
    %c0_i32_1 = arith.constant 0 : i32
    return %c0_i32, %c0_i32_0 : i32, i32
  }
  func.func @transform_6(%arg0: i32) -> (i32, i32, i32) {
    %c0_i32 = arith.constant 0 : i32
    %c0_i32_0 = arith.constant 0 : i32
    %c0_i32_1 = arith.constant 0 : i32
    %c0_i32_2 = arith.constant 0 : i32
    return %c0_i32, %c0_i32_0, %c0_i32_1 : i32, i32, i32
  }
  func.func @transform_7(%arg0: i32) -> (i32, i32) {
    %c0_i32 = arith.constant 0 : i32
    %c0_i32_0 = arith.constant 0 : i32
    %c0_i32_1 = arith.constant 0 : i32
    return %c0_i32, %c0_i32_0 : i32, i32
  }
  func.func @transform_8(%arg0: i32) -> (i32, i32) {
    %c0_i32 = arith.constant 0 : i32
    %c0_i32_0 = arith.constant 0 : i32
    %c0_i32_1 = arith.constant 0 : i32
    return %c0_i32, %c0_i32_0 : i32, i32
  }
  func.func @transform_9(%arg0: i32) -> (i32, i32) {
    %c0_i32 = arith.constant 0 : i32
    %c0_i32_0 = arith.constant 0 : i32
    %c0_i32_1 = arith.constant 0 : i32
    return %c0_i32, %c0_i32_0 : i32, i32
  }
  func.func @transform_10(%arg0: i32) -> (i32, i32, i32) {
    %c0_i32 = arith.constant 0 : i32
    %c0_i32_0 = arith.constant 0 : i32
    %c0_i32_1 = arith.constant 0 : i32
    %c0_i32_2 = arith.constant 0 : i32
    return %c0_i32, %c0_i32_0, %c0_i32_1 : i32, i32, i32
  }
  func.func @transform_11(%arg0: i32) -> (i32, i32, i32) {
    %c0_i32 = arith.constant 0 : i32
    %c0_i32_0 = arith.constant 0 : i32
    %c0_i32_1 = arith.constant 0 : i32
    %c0_i32_2 = arith.constant 0 : i32
    return %c0_i32, %c0_i32_0, %c0_i32_1 : i32, i32, i32
  }
  func.func @transform_12(%arg0: i32) -> (i32, i32, i32) {
    %c0_i32 = arith.constant 0 : i32
    %c0_i32_0 = arith.constant 0 : i32
    %c0_i32_1 = arith.constant 0 : i32
    %c0_i32_2 = arith.constant 0 : i32
    return %c0_i32, %c0_i32_0, %c0_i32_1 : i32, i32, i32
  }
  func.func @transform_13(%arg0: i32) -> (i32, i32, i32) {
    %c0_i32 = arith.constant 0 : i32
    %c0_i32_0 = arith.constant 0 : i32
    %c0_i32_1 = arith.constant 0 : i32
    %c0_i32_2 = arith.constant 0 : i32
    return %c0_i32, %c0_i32_0, %c0_i32_1 : i32, i32, i32
  }
  func.func @transform_14(%arg0: i32) -> (i32, i32, i32) {
    %c0_i32 = arith.constant 0 : i32
    %c0_i32_0 = arith.constant 0 : i32
    %c0_i32_1 = arith.constant 0 : i32
    %c0_i32_2 = arith.constant 0 : i32
    return %c0_i32, %c0_i32_0, %c0_i32_1 : i32, i32, i32
  }
  func.func @transform_15(%arg0: i32) -> (i32, i32, i32) {
    %c0_i32 = arith.constant 0 : i32
    %c0_i32_0 = arith.constant 0 : i32
    %c0_i32_1 = arith.constant 0 : i32
    %c0_i32_2 = arith.constant 0 : i32
    return %c0_i32, %c0_i32_0, %c0_i32_1 : i32, i32, i32
  }
  func.func @transform_16(%arg0: i32) -> (i32, i32, i32) {
    %c0_i32 = arith.constant 0 : i32
    %c0_i32_0 = arith.constant 0 : i32
    %c0_i32_1 = arith.constant 0 : i32
    %c0_i32_2 = arith.constant 0 : i32
    return %c0_i32, %c0_i32_0, %c0_i32_1 : i32, i32, i32
  }
  func.func @transform_17(%arg0: i32) -> (i32, i32, i32) {
    %c0_i32 = arith.constant 0 : i32
    %c0_i32_0 = arith.constant 0 : i32
    %c0_i32_1 = arith.constant 0 : i32
    return %arg0, %c0_i32, %c0_i32_0 : i32, i32, i32
  }
  func.func @transform_18(%arg0: i32) -> (i32, i32, i32) {
    %c0_i32 = arith.constant 0 : i32
    %c0_i32_0 = arith.constant 0 : i32
    %c0_i32_1 = arith.constant 0 : i32
    return %arg0, %c0_i32, %c0_i32_0 : i32, i32, i32
  }
}

</mosaic_0001>

<llo_original>
// kernel: glas_forward.1
$region0: #{glas_forward.1}
  #allocation0 [shape = 'u32[]', space=smem, size = 0x4, offset = 0x4, fixed_abs, tag = 'smem constant byte address 0x4 - core index']
  #allocation1 [shape = 'u32[144,128]{1,0:T(1,128)}', space=vmem, size = 0x12000, scoped, tag = 'internal scratch']
  #allocation2 [shape = 'f32[18,4]{1,0:T(8,128)}', space=vmem, size = 0x3000, scoped, tag = 'scratch operand']
  #allocation3 [shape = 'f32[18,32]{1,0:T(8,128)}', space=vmem, size = 0x3000, scoped, tag = 'scratch operand']
  #allocation4 [shape = 'f32[18,32]{1,0:T(8,128)}', space=vmem, size = 0x3000, scoped, tag = 'scratch operand']
  %s0 = inlined_call_operand.vmem [shape: f32[2,16,4], index: 0, kind: input, shape index: {}]
  %s1 = inlined_call_operand.vmem [shape: f32[2,1,4], index: 1, kind: input, shape index: {}]
  %s2 = inlined_call_operand.vmem [shape: f32[3,4,32], index: 2, kind: input, shape index: {}]
  %s3 = inlined_call_operand.vmem [shape: f32[1,32], index: 3, kind: input, shape index: {}]
  %s4 = inlined_call_operand.vmem [shape: f32[3,32,32], index: 4, kind: input, shape index: {}]
  %s5 = inlined_call_operand.vmem [shape: f32[1,32], index: 5, kind: input, shape index: {}]
  %s6 = inlined_call_operand.vmem [shape: f32[3,32,32], index: 6, kind: input, shape index: {}]
  %s7 = inlined_call_operand.vmem [shape: f32[1,32], index: 7, kind: input, shape index: {}]
  %s8 = inlined_call_operand.vmem [shape: f32[32,8], index: 8, kind: input, shape index: {}]
  %s9 = inlined_call_operand.vmem [shape: f32[1,8], index: 9, kind: input, shape index: {}]
  %s10 = inlined_call_operand.vmem [shape: f32[2,2,32], index: 10, kind: input, shape index: {}]
  %s11 = inlined_call_operand.vmem [shape: f32[2,8,32], index: 11, kind: input, shape index: {}]
  %s12 = inlined_call_operand.vmem [shape: f32[2,1,32], index: 12, kind: input, shape index: {}]
  %s13 = inlined_call_operand.vmem [shape: f32[2,32,2], index: 13, kind: input, shape index: {}]
  %s14 = inlined_call_operand.vmem [shape: f32[2,1,2], index: 14, kind: input, shape index: {}]
  %s15 = inlined_call_operand.vmem [shape: f32[2,32,2], index: 15, kind: input, shape index: {}]
  %s16 = inlined_call_operand.vmem [shape: f32[2,1,2], index: 16, kind: input, shape index: {}]
  %s17 = inlined_call_operand.hbm [shape: f32[2,1,4], index: 17, kind: output, shape index: {0}]
  %s18 = inlined_call_operand.vmem [shape: f32[2,1,1], index: 18, kind: output, shape index: {1}]
  %19 = xla_tuple %s17, %s18
  %s20 = sld [smem:[#allocation0]]
  $region109: #{glas_forward.1} parent=0
    _
  %s22 = ssub.s32 1, %s20
  %s23 = scalar_select 0, %s22, %s20
  $region1: #{glas_forward.1} parent=0
    #allocation5 [shape = 'u8[1024]{0}', space=vmem, size = 0x400, scoped, tag = 'output window, operand 0']
    #allocation6 [shape = 's32[2]{0}', space=sflag, size = 0x8, scoped, tag = 'scoped memory for glas_forward.1']
    %24 = vsyncpa [#allocation6], 0
    %s25 = scalar_lea.sflag [#allocation6], 1
    %26 = vsyncpa %s25, 0
    loop: start=0, step=1, limit=4
    $region2: #{glas_forward.1} parent=1 // loop_pre_header
      _
    $region3: #{glas_forward.1} parent=1 // loop_header
      %s28 = sphi 0, %s32
      %p29 = scmp.ge.s32.totalorder %s28, 4
      %s38 = sphi 0, %s40
      %s41 = sphi 0, %s38
      %s42 = sphi 0, %s41
      %s58 = sphi 0, %s42
      %s64 = sphi 0, %s66
      %s67 = sphi 0, %s64
      %s68 = sphi 0, %s67
      %s84 = sphi 0, %s68
      %s88 = sphi 0, %s88
      %s90 = sphi 0, %s88
      %s91 = sphi 0, %s90
      %s105 = sphi 0, %s91
      %s109 = sphi 0, %s109
      %s111 = sphi 0, %s109
      %s112 = sphi 0, %s111
      %s126 = sphi 0, %s112
      %s130 = sphi 0, %s130
      %s132 = sphi 0, %s130
      %s133 = sphi 0, %s132
      %s147 = sphi 0, %s133
      %s151 = sphi 0, %s151
      %s153 = sphi 0, %s151
      %s154 = sphi 0, %s153
      %s168 = sphi 0, %s154
      %s172 = sphi 0, %s172
      %s174 = sphi 0, %s172
      %s175 = sphi 0, %s174
      %s189 = sphi 0, %s175
      %s193 = sphi 0, %s193
      %s195 = sphi 0, %s193
      %s196 = sphi 0, %s195
      %s210 = sphi 0, %s196
      %s214 = sphi 0, %s214
      %s216 = sphi 0, %s214
      %s217 = sphi 0, %s216
      %s231 = sphi 0, %s217
      %s235 = sphi 0, %s235
      %s237 = sphi 0, %s235
      %s238 = sphi 0, %s237
      %s252 = sphi 0, %s238
      %s256 = sphi 0, %s256
      %s258 = sphi 0, %s256
      %s259 = sphi 0, %s258
      %s273 = sphi 0, %s259
      %s277 = sphi 0, %s277
      %s279 = sphi 0, %s277
      %s280 = sphi 0, %s279
      %s294 = sphi 0, %s280
      %s298 = sphi 0, %s298
      %s300 = sphi 0, %s298
      %s301 = sphi 0, %s300
      %s315 = sphi 0, %s301
      %s319 = sphi 0, %s319
      %s321 = sphi 0, %s319
      %s322 = sphi 0, %s321
      %s336 = sphi 0, %s322
      %s340 = sphi 0, %s340
      %s342 = sphi 0, %s340
      %s343 = sphi 0, %s342
      %s357 = sphi 0, %s343
      %s361 = sphi 0, %s361
      %s363 = sphi 0, %s361
      %s364 = sphi 0, %s363
      %s378 = sphi 0, %s364
      %s382 = sphi 0, %s382
      %s384 = sphi 0, %s382
      %s385 = sphi 0, %s384
      %s399 = sphi 0, %s385
      %s405 = sphi 0, %s407
      %s408 = sphi 0, %s405
      %s409 = sphi 0, %s408
      %s425 = sphi 0, %s409
      %s431 = sphi 0, %s433
      %s434 = sphi 0, %s431
      %s435 = sphi 0, %s434
      %s451 = sphi 0, %s435
    $region4: #{glas_forward.1} parent=1 // loop_header_branch
      %31 = sbr.rel (%p29) target = $region8
    $region5: #{glas_forward.1} parent=1 // loop_body
      %s33 = ssub.s32 %s28, 1
      %s34 = ssub.s32 %s28, 2
      %s35 = sadd.s32 %s28, 1
      %s36 = ssub.s32 %s28, %s35
      %p37 = scmp.eq.s32.totalorder %s36, 0
      %s39 = sadd.s32 %s38, 1
      %s40 = scalar_select %p37, %s38, %s39
      %p43 = pneg %p37
      %p44 = scmp.eq.s32.totalorder %s28, 1
      %p45 = por %p43, %p44
      %p46 = scmp.ne.s32.totalorder %s38, %s41
      %p47 = scmp.eq.s32.totalorder %s28, 0
      %p48 = por %p46, %p47
      %p49 = scmp.ne.s32.totalorder %s38, %s41
      %p50 = scmp.eq.s32.totalorder %s33, 1
      %p51 = por %p49, %p50
      %p52 = scmp.ne.s32.totalorder %s41, %s42
      %p53 = scmp.eq.s32.totalorder %s33, 0
      %p54 = por %p52, %p53
      %p55 = scmp.ne.s32.totalorder %s41, %s42
      %p56 = scmp.eq.s32.totalorder %s34, 1
      %p57 = por %p55, %p56
      %p59 = scmp.ne.s32.totalorder %s42, %s58
      %p60 = scmp.eq.s32.totalorder %s34, 0
      %p61 = por %p59, %p60
      %s62 = ssub.s32 %s28, %s35
      %p63 = scmp.eq.s32.totalorder %s62, 0
      %s65 = sadd.s32 %s64, 1
      %s66 = scalar_select %p63, %s64, %s65
      %p69 = pneg %p63
      %p70 = scmp.eq.s32.totalorder %s28, 1
      %p71 = por %p69, %p70
      %p72 = scmp.ne.s32.totalorder %s64, %s67
      %p73 = scmp.eq.s32.totalorder %s28, 0
      %p74 = por %p72, %p73
      %p75 = scmp.ne.s32.totalorder %s64, %s67
      %p76 = scmp.eq.s32.totalorder %s33, 1
      %p77 = por %p75, %p76
      %p78 = scmp.ne.s32.totalorder %s67, %s68
      %p79 = scmp.eq.s32.totalorder %s33, 0
      %p80 = por %p78, %p79
      %p81 = scmp.ne.s32.totalorder %s67, %s68
      %p82 = scmp.eq.s32.totalorder %s34, 1
      %p83 = por %p81, %p82
      %p85 = scmp.ne.s32.totalorder %s68, %s84
      %p86 = scmp.eq.s32.totalorder %s34, 0
      %p87 = por %p85, %p86
      %s89 = sadd.s32 %s88, 1
      %p92 = scmp.eq.s32.totalorder %s28, 1
      %p93 = scmp.ne.s32.totalorder %s88, %s90
      %p94 = scmp.eq.s32.totalorder %s28, 0
      %p95 = por %p93, %p94
      %p96 = scmp.ne.s32.totalorder %s88, %s90
      %p97 = scmp.eq.s32.totalorder %s33, 1
      %p98 = por %p96, %p97
      %p99 = scmp.ne.s32.totalorder %s90, %s91
      %p100 = scmp.eq.s32.totalorder %s33, 0
      %p101 = por %p99, %p100
      %p102 = scmp.ne.s32.totalorder %s90, %s91
      %p103 = scmp.eq.s32.totalorder %s34, 1
      %p104 = por %p102, %p103
      %p106 = scmp.ne.s32.totalorder %s91, %s105
      %p107 = scmp.eq.s32.totalorder %s34, 0
      %p108 = por %p106, %p107
      %s110 = sadd.s32 %s109, 1
      %p113 = scmp.eq.s32.totalorder %s28, 1
      %p114 = scmp.ne.s32.totalorder %s109, %s111
      %p115 = scmp.eq.s32.totalorder %s28, 0
      %p116 = por %p114, %p115
      %p117 = scmp.ne.s32.totalorder %s109, %s111
      %p118 = scmp.eq.s32.totalorder %s33, 1
      %p119 = por %p117, %p118
      %p120 = scmp.ne.s32.totalorder %s111, %s112
      %p121 = scmp.eq.s32.totalorder %s33, 0
      %p122 = por %p120, %p121
      %p123 = scmp.ne.s32.totalorder %s111, %s112
      %p124 = scmp.eq.s32.totalorder %s34, 1
      %p125 = por %p123, %p124
      %p127 = scmp.ne.s32.totalorder %s112, %s126
      %p128 = scmp.eq.s32.totalorder %s34, 0
      %p129 = por %p127, %p128
      %s131 = sadd.s32 %s130, 1
      %p134 = scmp.eq.s32.totalorder %s28, 1
      %p135 = scmp.ne.s32.totalorder %s130, %s132
      %p136 = scmp.eq.s32.totalorder %s28, 0
      %p137 = por %p135, %p136
      %p138 = scmp.ne.s32.totalorder %s130, %s132
      %p139 = scmp.eq.s32.totalorder %s33, 1
      %p140 = por %p138, %p139
      %p141 = scmp.ne.s32.totalorder %s132, %s133
      %p142 = scmp.eq.s32.totalorder %s33, 0
      %p143 = por %p141, %p142
      %p144 = scmp.ne.s32.totalorder %s132, %s133
      %p145 = scmp.eq.s32.totalorder %s34, 1
      %p146 = por %p144, %p145
      %p148 = scmp.ne.s32.totalorder %s133, %s147
      %p149 = scmp.eq.s32.totalorder %s34, 0
      %p150 = por %p148, %p149
      %s152 = sadd.s32 %s151, 1
      %p155 = scmp.eq.s32.totalorder %s28, 1
      %p156 = scmp.ne.s32.totalorder %s151, %s153
      %p157 = scmp.eq.s32.totalorder %s28, 0
      %p158 = por %p156, %p157
      %p159 = scmp.ne.s32.totalorder %s151, %s153
      %p160 = scmp.eq.s32.totalorder %s33, 1
      %p161 = por %p159, %p160
      %p162 = scmp.ne.s32.totalorder %s153, %s154
      %p163 = scmp.eq.s32.totalorder %s33, 0
      %p164 = por %p162, %p163
      %p165 = scmp.ne.s32.totalorder %s153, %s154
      %p166 = scmp.eq.s32.totalorder %s34, 1
      %p167 = por %p165, %p166
      %p169 = scmp.ne.s32.totalorder %s154, %s168
      %p170 = scmp.eq.s32.totalorder %s34, 0
      %p171 = por %p169, %p170
      %s173 = sadd.s32 %s172, 1
      %p176 = scmp.eq.s32.totalorder %s28, 1
      %p177 = scmp.ne.s32.totalorder %s172, %s174
      %p178 = scmp.eq.s32.totalorder %s28, 0
      %p179 = por %p177, %p178
      %p180 = scmp.ne.s32.totalorder %s172, %s174
      %p181 = scmp.eq.s32.totalorder %s33, 1
      %p182 = por %p180, %p181
      %p183 = scmp.ne.s32.totalorder %s174, %s175
      %p184 = scmp.eq.s32.totalorder %s33, 0
      %p185 = por %p183, %p184
      %p186 = scmp.ne.s32.totalorder %s174, %s175
      %p187 = scmp.eq.s32.totalorder %s34, 1
      %p188 = por %p186, %p187
      %p190 = scmp.ne.s32.totalorder %s175, %s189
      %p191 = scmp.eq.s32.totalorder %s34, 0
      %p192 = por %p190, %p191
      %s194 = sadd.s32 %s193, 1
      %p197 = scmp.eq.s32.totalorder %s28, 1
      %p198 = scmp.ne.s32.totalorder %s193, %s195
      %p199 = scmp.eq.s32.totalorder %s28, 0
      %p200 = por %p198, %p199
      %p201 = scmp.ne.s32.totalorder %s193, %s195
      %p202 = scmp.eq.s32.totalorder %s33, 1
      %p203 = por %p201, %p202
      %p204 = scmp.ne.s32.totalorder %s195, %s196
      %p205 = scmp.eq.s32.totalorder %s33, 0
      %p206 = por %p204, %p205
      %p207 = scmp.ne.s32.totalorder %s195, %s196
      %p208 = scmp.eq.s32.totalorder %s34, 1
      %p209 = por %p207, %p208
      %p211 = scmp.ne.s32.totalorder %s196, %s210
      %p212 = scmp.eq.s32.totalorder %s34, 0
      %p213 = por %p211, %p212
      %s215 = sadd.s32 %s214, 1
      %p218 = scmp.eq.s32.totalorder %s28, 1
      %p219 = scmp.ne.s32.totalorder %s214, %s216
      %p220 = scmp.eq.s32.totalorder %s28, 0
      %p221 = por %p219, %p220
      %p222 = scmp.ne.s32.totalorder %s214, %s216
      %p223 = scmp.eq.s32.totalorder %s33, 1
      %p224 = por %p222, %p223
      %p225 = scmp.ne.s32.totalorder %s216, %s217
      %p226 = scmp.eq.s32.totalorder %s33, 0
      %p227 = por %p225, %p226
      %p228 = scmp.ne.s32.totalorder %s216, %s217
      %p229 = scmp.eq.s32.totalorder %s34, 1
      %p230 = por %p228, %p229
      %p232 = scmp.ne.s32.totalorder %s217, %s231
      %p233 = scmp.eq.s32.totalorder %s34, 0
      %p234 = por %p232, %p233
      %s236 = sadd.s32 %s235, 1
      %p239 = scmp.eq.s32.totalorder %s28, 1
      %p240 = scmp.ne.s32.totalorder %s235, %s237
      %p241 = scmp.eq.s32.totalorder %s28, 0
      %p242 = por %p240, %p241
      %p243 = scmp.ne.s32.totalorder %s235, %s237
      %p244 = scmp.eq.s32.totalorder %s33, 1
      %p245 = por %p243, %p244
      %p246 = scmp.ne.s32.totalorder %s237, %s238
      %p247 = scmp.eq.s32.totalorder %s33, 0
      %p248 = por %p246, %p247
      %p249 = scmp.ne.s32.totalorder %s237, %s238
      %p250 = scmp.eq.s32.totalorder %s34, 1
      %p251 = por %p249, %p250
      %p253 = scmp.ne.s32.totalorder %s238, %s252
      %p254 = scmp.eq.s32.totalorder %s34, 0
      %p255 = por %p253, %p254
      %s257 = sadd.s32 %s256, 1
      %p260 = scmp.eq.s32.totalorder %s28, 1
      %p261 = scmp.ne.s32.totalorder %s256, %s258
      %p262 = scmp.eq.s32.totalorder %s28, 0
      %p263 = por %p261, %p262
      %p264 = scmp.ne.s32.totalorder %s256, %s258
      %p265 = scmp.eq.s32.totalorder %s33, 1
      %p266 = por %p264, %p265
      %p267 = scmp.ne.s32.totalorder %s258, %s259
      %p268 = scmp.eq.s32.totalorder %s33, 0
      %p269 = por %p267, %p268
      %p270 = scmp.ne.s32.totalorder %s258, %s259
      %p271 = scmp.eq.s32.totalorder %s34, 1
      %p272 = por %p270, %p271
      %p274 = scmp.ne.s32.totalorder %s259, %s273
      %p275 = scmp.eq.s32.totalorder %s34, 0
      %p276 = por %p274, %p275
      %s278 = sadd.s32 %s277, 1
      %p281 = scmp.eq.s32.totalorder %s28, 1
      %p282 = scmp.ne.s32.totalorder %s277, %s279
      %p283 = scmp.eq.s32.totalorder %s28, 0
      %p284 = por %p282, %p283
      %p285 = scmp.ne.s32.totalorder %s277, %s279
      %p286 = scmp.eq.s32.totalorder %s33, 1
      %p287 = por %p285, %p286
      %p288 = scmp.ne.s32.totalorder %s279, %s280
      %p289 = scmp.eq.s32.totalorder %s33, 0
      %p290 = por %p288, %p289
      %p291 = scmp.ne.s32.totalorder %s279, %s280
      %p292 = scmp.eq.s32.totalorder %s34, 1
      %p293 = por %p291, %p292
      %p295 = scmp.ne.s32.totalorder %s280, %s294
      %p296 = scmp.eq.s32.totalorder %s34, 0
      %p297 = por %p295, %p296
      %s299 = sadd.s32 %s298, 1
      %p302 = scmp.eq.s32.totalorder %s28, 1
      %p303 = scmp.ne.s32.totalorder %s298, %s300
      %p304 = scmp.eq.s32.totalorder %s28, 0
      %p305 = por %p303, %p304
      %p306 = scmp.ne.s32.totalorder %s298, %s300
      %p307 = scmp.eq.s32.totalorder %s33, 1
      %p308 = por %p306, %p307
      %p309 = scmp.ne.s32.totalorder %s300, %s301
      %p310 = scmp.eq.s32.totalorder %s33, 0
      %p311 = por %p309, %p310
      %p312 = scmp.ne.s32.totalorder %s300, %s301
      %p313 = scmp.eq.s32.totalorder %s34, 1
      %p314 = por %p312, %p313
      %p316 = scmp.ne.s32.totalorder %s301, %s315
      %p317 = scmp.eq.s32.totalorder %s34, 0
      %p318 = por %p316, %p317
      %s320 = sadd.s32 %s319, 1
      %p323 = scmp.eq.s32.totalorder %s28, 1
      %p324 = scmp.ne.s32.totalorder %s319, %s321
      %p325 = scmp.eq.s32.totalorder %s28, 0
      %p326 = por %p324, %p325
      %p327 = scmp.ne.s32.totalorder %s319, %s321
      %p328 = scmp.eq.s32.totalorder %s33, 1
      %p329 = por %p327, %p328
      %p330 = scmp.ne.s32.totalorder %s321, %s322
      %p331 = scmp.eq.s32.totalorder %s33, 0
      %p332 = por %p330, %p331
      %p333 = scmp.ne.s32.totalorder %s321, %s322
      %p334 = scmp.eq.s32.totalorder %s34, 1
      %p335 = por %p333, %p334
      %p337 = scmp.ne.s32.totalorder %s322, %s336
      %p338 = scmp.eq.s32.totalorder %s34, 0
      %p339 = por %p337, %p338
      %s341 = sadd.s32 %s340, 1
      %p344 = scmp.eq.s32.totalorder %s28, 1
      %p345 = scmp.ne.s32.totalorder %s340, %s342
      %p346 = scmp.eq.s32.totalorder %s28, 0
      %p347 = por %p345, %p346
      %p348 = scmp.ne.s32.totalorder %s340, %s342
      %p349 = scmp.eq.s32.totalorder %s33, 1
      %p350 = por %p348, %p349
      %p351 = scmp.ne.s32.totalorder %s342, %s343
      %p352 = scmp.eq.s32.totalorder %s33, 0
      %p353 = por %p351, %p352
      %p354 = scmp.ne.s32.totalorder %s342, %s343
      %p355 = scmp.eq.s32.totalorder %s34, 1
      %p356 = por %p354, %p355
      %p358 = scmp.ne.s32.totalorder %s343, %s357
      %p359 = scmp.eq.s32.totalorder %s34, 0
      %p360 = por %p358, %p359
      %s362 = sadd.s32 %s361, 1
      %p365 = scmp.eq.s32.totalorder %s28, 1
      %p366 = scmp.ne.s32.totalorder %s361, %s363
      %p367 = scmp.eq.s32.totalorder %s28, 0
      %p368 = por %p366, %p367
      %p369 = scmp.ne.s32.totalorder %s361, %s363
      %p370 = scmp.eq.s32.totalorder %s33, 1
      %p371 = por %p369, %p370
      %p372 = scmp.ne.s32.totalorder %s363, %s364
      %p373 = scmp.eq.s32.totalorder %s33, 0
      %p374 = por %p372, %p373
      %p375 = scmp.ne.s32.totalorder %s363, %s364
      %p376 = scmp.eq.s32.totalorder %s34, 1
      %p377 = por %p375, %p376
      %p379 = scmp.ne.s32.totalorder %s364, %s378
      %p380 = scmp.eq.s32.totalorder %s34, 0
      %p381 = por %p379, %p380
      %s383 = sadd.s32 %s382, 1
      %p386 = scmp.eq.s32.totalorder %s28, 1
      %p387 = scmp.ne.s32.totalorder %s382, %s384
      %p388 = scmp.eq.s32.totalorder %s28, 0
      %p389 = por %p387, %p388
      %p390 = scmp.ne.s32.totalorder %s382, %s384
      %p391 = scmp.eq.s32.totalorder %s33, 1
      %p392 = por %p390, %p391
      %p393 = scmp.ne.s32.totalorder %s384, %s385
      %p394 = scmp.eq.s32.totalorder %s33, 0
      %p395 = por %p393, %p394
      %p396 = scmp.ne.s32.totalorder %s384, %s385
      %p397 = scmp.eq.s32.totalorder %s34, 1
      %p398 = por %p396, %p397
      %p400 = scmp.ne.s32.totalorder %s385, %s399
      %p401 = scmp.eq.s32.totalorder %s34, 0
      %p402 = por %p400, %p401
      %s403 = ssub.s32 %s28, %s35
      %p404 = scmp.eq.s32.totalorder %s403, 0
      %s406 = sadd.s32 %s405, 1
      %s407 = scalar_select %p404, %s405, %s406
      %p410 = pneg %p404
      %p411 = scmp.eq.s32.totalorder %s28, 1
      %p412 = por %p410, %p411
      %p413 = scmp.ne.s32.totalorder %s405, %s408
      %p414 = scmp.eq.s32.totalorder %s28, 0
      %p415 = por %p413, %p414
      %p416 = scmp.ne.s32.totalorder %s405, %s408
      %p417 = scmp.eq.s32.totalorder %s33, 1
      %p418 = por %p416, %p417
      %p419 = scmp.ne.s32.totalorder %s408, %s409
      %p420 = scmp.eq.s32.totalorder %s33, 0
      %p421 = por %p419, %p420
      %p422 = scmp.ne.s32.totalorder %s408, %s409
      %p423 = scmp.eq.s32.totalorder %s34, 1
      %p424 = por %p422, %p423
      %p426 = scmp.ne.s32.totalorder %s409, %s425
      %p427 = scmp.eq.s32.totalorder %s34, 0
      %p428 = por %p426, %p427
      %s429 = ssub.s32 %s28, %s35
      %p430 = scmp.eq.s32.totalorder %s429, 0
      %s432 = sadd.s32 %s431, 1
      %s433 = scalar_select %p430, %s431, %s432
      %p436 = pneg %p430
      %p437 = scmp.eq.s32.totalorder %s28, 1
      %p438 = por %p436, %p437
      %p439 = scmp.ne.s32.totalorder %s431, %s434
      %p440 = scmp.eq.s32.totalorder %s28, 0
      %p441 = por %p439, %p440
      %p442 = scmp.ne.s32.totalorder %s431, %s434
      %p443 = scmp.eq.s32.totalorder %s33, 1
      %p444 = por %p442, %p443
      %p445 = scmp.ne.s32.totalorder %s434, %s435
      %p446 = scmp.eq.s32.totalorder %s33, 0
      %p447 = por %p445, %p446
      %p448 = scmp.ne.s32.totalorder %s434, %s435
      %p449 = scmp.eq.s32.totalorder %s34, 1
      %p450 = por %p448, %p449
      %p452 = scmp.ne.s32.totalorder %s435, %s451
      %p453 = scmp.eq.s32.totalorder %s34, 0
      %p454 = por %p452, %p453
      %p455 = scmp.le.s32.totalorder 1, %s28
      %p456 = scmp.lt.s32.totalorder %s28, 3
      %p457 = pnand %p455, %p456
      %p458 = pneg %p457
      // Predicated region
      $region9: #{glas_forward.1} parent=5 // pred_check
        _
      $region10: #{glas_forward.1} parent=5 // pred_check_branch
        %460 = sbr.rel (%p457) target = $region12
      $region11: #{glas_forward.1} parent=5 // pred_region
        %s461 = ssub.s32 %s28, 1
        // Predicated region
        $region13: #{glas_forward.1} parent=11 // pred_check
          %p462 = pneg %p101
        $region14: #{glas_forward.1} parent=11 // pred_check_branch
          %464 = sbr.rel (%p462) target = $region16
        $region15: #{glas_forward.1} parent=11 // pred_region
          _
        $region16: #{glas_forward.1} parent=11 // pred_fallthru
          _
        // Predicated region
        $region17: #{glas_forward.1} parent=11 // pred_check
          %p465 = pneg %p122
        $region18: #{glas_forward.1} parent=11 // pred_check_branch
          %467 = sbr.rel (%p465) target = $region20
        $region19: #{glas_forward.1} parent=11 // pred_region
          _
        $region20: #{glas_forward.1} parent=11 // pred_fallthru
          _
        // Predicated region
        $region21: #{glas_forward.1} parent=11 // pred_check
          %p468 = pneg %p143
        $region22: #{glas_forward.1} parent=11 // pred_check_branch
          %470 = sbr.rel (%p468) target = $region24
        $region23: #{glas_forward.1} parent=11 // pred_region
          _
        $region24: #{glas_forward.1} parent=11 // pred_fallthru
          _
        // Predicated region
        $region25: #{glas_forward.1} parent=11 // pred_check
          %p471 = pneg %p164
        $region26: #{glas_forward.1} parent=11 // pred_check_branch
          %473 = sbr.rel (%p471) target = $region28
        $region27: #{glas_forward.1} parent=11 // pred_region
          _
        $region28: #{glas_forward.1} parent=11 // pred_fallthru
          _
        // Predicated region
        $region29: #{glas_forward.1} parent=11 // pred_check
          %p474 = pneg %p185
        $region30: #{glas_forward.1} parent=11 // pred_check_branch
          %476 = sbr.rel (%p474) target = $region32
        $region31: #{glas_forward.1} parent=11 // pred_region
          _
        $region32: #{glas_forward.1} parent=11 // pred_fallthru
          _
        // Predicated region
        $region33: #{glas_forward.1} parent=11 // pred_check
          %p477 = pneg %p206
        $region34: #{glas_forward.1} parent=11 // pred_check_branch
          %479 = sbr.rel (%p477) target = $region36
        $region35: #{glas_forward.1} parent=11 // pred_region
          _
        $region36: #{glas_forward.1} parent=11 // pred_fallthru
          _
        // Predicated region
        $region37: #{glas_forward.1} parent=11 // pred_check
          %p480 = pneg %p227
        $region38: #{glas_forward.1} parent=11 // pred_check_branch
          %482 = sbr.rel (%p480) target = $region40
        $region39: #{glas_forward.1} parent=11 // pred_region
          _
        $region40: #{glas_forward.1} parent=11 // pred_fallthru
          _
        // Predicated region
        $region41: #{glas_forward.1} parent=11 // pred_check
          %p483 = pneg %p248
        $region42: #{glas_forward.1} parent=11 // pred_check_branch
          %485 = sbr.rel (%p483) target = $region44
        $region43: #{glas_forward.1} parent=11 // pred_region
          _
        $region44: #{glas_forward.1} parent=11 // pred_fallthru
          _
        // Predicated region
        $region45: #{glas_forward.1} parent=11 // pred_check
          %p486 = pneg %p269
        $region46: #{glas_forward.1} parent=11 // pred_check_branch
          %488 = sbr.rel (%p486) target = $region48
        $region47: #{glas_forward.1} parent=11 // pred_region
          _
        $region48: #{glas_forward.1} parent=11 // pred_fallthru
          _
        // Predicated region
        $region49: #{glas_forward.1} parent=11 // pred_check
          %p489 = pneg %p290
        $region50: #{glas_forward.1} parent=11 // pred_check_branch
          %491 = sbr.rel (%p489) target = $region52
        $region51: #{glas_forward.1} parent=11 // pred_region
          _
        $region52: #{glas_forward.1} parent=11 // pred_fallthru
          _
        // Predicated region
        $region53: #{glas_forward.1} parent=11 // pred_check
          %p492 = pneg %p311
        $region54: #{glas_forward.1} parent=11 // pred_check_branch
          %494 = sbr.rel (%p492) target = $region56
        $region55: #{glas_forward.1} parent=11 // pred_region
          _
        $region56: #{glas_forward.1} parent=11 // pred_fallthru
          _
        // Predicated region
        $region57: #{glas_forward.1} parent=11 // pred_check
          %p495 = pneg %p332
        $region58: #{glas_forward.1} parent=11 // pred_check_branch
          %497 = sbr.rel (%p495) target = $region60
        $region59: #{glas_forward.1} parent=11 // pred_region
          _
        $region60: #{glas_forward.1} parent=11 // pred_fallthru
          _
        // Predicated region
        $region61: #{glas_forward.1} parent=11 // pred_check
          %p498 = pneg %p353
        $region62: #{glas_forward.1} parent=11 // pred_check_branch
          %500 = sbr.rel (%p498) target = $region64
        $region63: #{glas_forward.1} parent=11 // pred_region
          _
        $region64: #{glas_forward.1} parent=11 // pred_fallthru
          _
        // Predicated region
        $region65: #{glas_forward.1} parent=11 // pred_check
          %p501 = pneg %p374
        $region66: #{glas_forward.1} parent=11 // pred_check_branch
          %503 = sbr.rel (%p501) target = $region68
        $region67: #{glas_forward.1} parent=11 // pred_region
          _
        $region68: #{glas_forward.1} parent=11 // pred_fallthru
          _
        // Predicated region
        $region69: #{glas_forward.1} parent=11 // pred_check
          %p504 = pneg %p395
        $region70: #{glas_forward.1} parent=11 // pred_check_branch
          %506 = sbr.rel (%p504) target = $region72
        $region71: #{glas_forward.1} parent=11 // pred_region
          _
        $region72: #{glas_forward.1} parent=11 // pred_fallthru
          _
      $region12: #{glas_forward.1} parent=5 // pred_fallthru
        _
      %p507 = scmp.lt.s32.totalorder %s28, 2
      // Predicated region
      $region73: #{glas_forward.1} parent=5 // pred_check
        %p508 = pneg %p507
      $region74: #{glas_forward.1} parent=5 // pred_check_branch
        %510 = sbr.rel (%p508) target = $region76
      $region75: #{glas_forward.1} parent=5 // pred_region
        // Predicated region
        $region77: #{glas_forward.1} parent=75 // pred_check
          %p511 = pneg %p48
        $region78: #{glas_forward.1} parent=75 // pred_check_branch
          %513 = sbr.rel (%p511) target = $region80
        $region79: #{glas_forward.1} parent=75 // pred_region
          %p514 = scmp.lt.s32.totalorder %s28, 1
          %s515 = scalar_select %p514, %s28, 1
          %s516 = smul.addr %s515, 2
          %s517 = smul.addr %s516, 8
          %s518 = scalar_lea.vmem %s0, %s517
        $region80: #{glas_forward.1} parent=75 // pred_fallthru
          _
        // Predicated region
        $region81: #{glas_forward.1} parent=75 // pred_check
          %p519 = pneg %p74
        $region82: #{glas_forward.1} parent=75 // pred_check_branch
          %521 = sbr.rel (%p519) target = $region84
        $region83: #{glas_forward.1} parent=75 // pred_region
          %p522 = scmp.lt.s32.totalorder %s28, 1
          %s523 = scalar_select %p522, %s28, 1
          %s524 = scalar_lea.vmem %s1, %s523
        $region84: #{glas_forward.1} parent=75 // pred_fallthru
          _
      $region76: #{glas_forward.1} parent=5 // pred_fallthru
        _
      %p525 = scmp.le.s32.totalorder 1, %s28
      %p526 = scmp.lt.s32.totalorder %s28, 3
      %p527 = pnand %p525, %p526
      %p528 = pneg %p527
      // Predicated region
      $region85: #{glas_forward.1} parent=5 // pred_check
        _
      $region86: #{glas_forward.1} parent=5 // pred_check_branch
        %530 = sbr.rel (%p527) target = $region88
      $region87: #{glas_forward.1} parent=5 // pred_region
        %s531 = ssub.s32 %s28, 1
        %p532 = scmp.lt.s32.totalorder %s33, 1
        %s533 = scalar_select %p532, %s33, 1
        %s534 = smul.addr %s533, 2
        %s535 = smul.addr %s534, 8
        %s536 = scalar_lea.vmem %s0, %s535
        %p537 = pneg %p54
        %p538 = pneg %p51
        %p539 = scmp.lt.s32.totalorder %s33, 1
        %s540 = scalar_select %p539, %s33, 1
        %s541 = scalar_lea.vmem %s1, %s540
        %p542 = pneg %p80
        %p543 = pneg %p77
        %p544 = pneg %p101
        %p545 = pneg %p98
        %p546 = pneg %p122
        %p547 = pneg %p119
        %p548 = pneg %p143
        %p549 = pneg %p140
        %p550 = pneg %p164
        %p551 = pneg %p161
        %p552 = pneg %p185
        %p553 = pneg %p182
        %p554 = pneg %p206
        %p555 = pneg %p203
        %p556 = pneg %p227
        %p557 = pneg %p224
        %p558 = pneg %p248
        %p559 = pneg %p245
        %p560 = pneg %p269
        %p561 = pneg %p266
        %p562 = pneg %p290
        %p563 = pneg %p287
        %p564 = pneg %p311
        %p565 = pneg %p308
        %p566 = pneg %p332
        %p567 = pneg %p329
        %p568 = pneg %p353
        %p569 = pneg %p350
        %p570 = pneg %p374
        %p571 = pneg %p371
        %p572 = pneg %p395
        %p573 = pneg %p392
        %p574 = pneg %p421
        %p575 = pneg %p418
        %s576 = sand.u32 %s408, 1
        %s577 = scalar_lea.sflag [#allocation6], %s576
        %s578 = sand.u32 %s408, 1
        %s579 = scalar_lea.vmem [#allocation5], %s578
        %p580 = pneg %p447
        %p581 = pneg %p444
        %p582 = scmp.lt.s32.totalorder %s33, 1
        %s583 = scalar_select %p582, %s33, 1
        %s584 = scalar_lea.vmem %s18, %s583
        %p585 = scmp.lt.s32.totalorder %s33, 1
        %s586 = scalar_select %p585, %s33, 1
        %s587 = smul.addr %s586, 2
        %s588 = smul.addr %s587, 8
        %s589 = scalar_lea.vmem %s0, %s588
        %p590 = scmp.lt.s32.totalorder %s33, 1
        %s591 = scalar_select %p590, %s33, 1
        %s592 = scalar_lea.vmem %s1, %s591
        %p593 = scmp.lt.s32.totalorder %s33, 1
        %s594 = scalar_select %p593, %s33, 1
        %s595 = scalar_lea.vmem %s18, %s594
        %vm596 = vcmask 31744
        %597 = vst.msk [vmem:[#allocation2] sm:$0xff] %vm596, 0.0
        %598 = vst.msk [vmem:[#allocation2 + $0x8] sm:$0xff] %vm596, 0.0
        %vm599 = vcmask 25600
        %600 = vst.msk [vmem:[#allocation2 + $0x10] sm:$0x3] %vm599, 0.0
        %v601 = vld [vmem:[%s589] sm:$0xff]
        %v602 = vld [vmem:[%s589 + $0x8] sm:$0xff]
        %603 = vst.msk [vmem:[#allocation2 + $0x1] sm:$0xff] %vm596, %v601
        %604 = vst.msk [vmem:[#allocation2 + $0x9] sm:$0xff] %vm596, %v602
        %v605 = vld [vmem:[#allocation2] sm:$0xff]
        %v606 = vld [vmem:[#allocation2 + $0x8] sm:$0xff]
        %v607 = vld [vmem:[%s2] sm:$0xf]
        %v608 = vld [vmem:[#allocation2 + $0x1] sm:$0xff]
        %v609 = vld [vmem:[#allocation2 + $0x9] sm:$0xff]
        %s610 = scalar_lea.vmem %s2, 4
        %v611 = vld [vmem:[%s610] sm:$0xf]
        %v613 = vsel %vm596, %v608, 0
        %v616 = vsel %vm596, %v609, 0
        %vm618 = vcmask 1043456
        %v620 = vsel %vm618, %v611, 0
        %622 = vmatprep.subr.mxu0 0.0
        %623 = vmatpush1.msra.mxu0 0.0
        %624 = vmatprep.subr.mxu0 0.0
        %625 = vmatpush1.msra.mxu0 0.0
        %626 = vmatprep.subr.mxu0 0.0
        %627 = vmatpush1.msra.mxu0 0.0
        %628 = vmatprep.subr.mxu0 0.0
        %629 = vmatpush1.msra.mxu0 0.0
        %630 = vmatprep.subr.mxu0 0.0
        %631 = vmatpush1.msra.mxu0 0.0
        %632 = vmatprep.subr.mxu0 0.0
        %633 = vmatpush1.msra.mxu0 0.0
        %634 = vmatprep.subr.mxu0 0.0
        %635 = vmatpush1.msra.mxu0 0.0
        %636 = vmatprep.subr.mxu0 0.0
        %637 = vmatpush1.msra.mxu0 0.0
        %638 = vmatprep.subr.mxu0 0.0
        %639 = vmatpush1.msra.mxu0 0.0
        %640 = vmatprep.subr.mxu0 0.0
        %641 = vmatpush1.msra.mxu0 0.0
        %642 = vmatprep.subr.mxu0 0.0
        %643 = vmatpush1.msra.mxu0 0.0
        %644 = vmatprep.subr.mxu0 0.0
        %645 = vmatpush1.msra.mxu0 0.0
        %646 = vmatprep.subr.mxu0 0.0
        %647 = vmatpush1.msra.mxu0 0.0
        %648 = vmatprep.subr.mxu0 0.0
        %649 = vmatpush1.msra.mxu0 0.0
        %650 = vmatprep.subr.mxu0 0.0
        %651 = vmatpush1.msra.mxu0 0.0
        %652 = vmatprep.subr.mxu0 0.0
        %653 = vmatpush1.msra.mxu0 %v620
        %654 = vmatprep.subr.mxu0 0.0
        %655 = vmatpush2.msra.mxu0 0.0
        %656 = vmatprep.subr.mxu0 0.0
        %657 = vmatpush2.msra.mxu0 0.0
        %658 = vmatprep.subr.mxu0 0.0
        %659 = vmatpush2.msra.mxu0 0.0
        %660 = vmatprep.subr.mxu0 0.0
        %661 = vmatpush2.msra.mxu0 0.0
        %662 = vmatprep.subr.mxu0 0.0
        %663 = vmatpush2.msra.mxu0 0.0
        %664 = vmatprep.subr.mxu0 0.0
        %665 = vmatpush2.msra.mxu0 0.0
        %666 = vmatprep.subr.mxu0 0.0
        %667 = vmatpush2.msra.mxu0 0.0
        %668 = vmatprep.subr.mxu0 0.0
        %669 = vmatpush2.msra.mxu0 0.0
        %670 = vmatprep.subr.mxu0 0.0
        %671 = vmatpush2.msra.mxu0 0.0
        %672 = vmatprep.subr.mxu0 0.0
        %673 = vmatpush2.msra.mxu0 0.0
        %674 = vmatprep.subr.mxu0 0.0
        %675 = vmatpush2.msra.mxu0 0.0
        %676 = vmatprep.subr.mxu0 0.0
        %677 = vmatpush2.msra.mxu0 0.0
        %678 = vmatprep.subr.mxu0 0.0
        %679 = vmatpush2.msra.mxu0 0.0
        %680 = vmatprep.subr.mxu0 0.0
        %681 = vmatpush2.msra.mxu0 0.0
        %682 = vmatprep.subr.mxu0 0.0
        %683 = vmatpush2.msra.mxu0 0.0
        %684 = vmatprep.subr.mxu0 0.0
        %685 = vmatpush2.msra.mxu0 0.0
        %686 = vmatprep.mubr.f32.mxu0 0.0
        %687 = vmatmul.mubr.f32.gmra.mxu0 %v613
        %v688 = vpop.f32.mrf.mxu0
        %v689 = vadd.f32 0.0, %v688
        %v690 = vpop.f32.mrf.mxu0
        %691 = vmatprep.mubr.f32.mxu0 0.0
        %692 = vmatmul.mubr.f32.gmra.mxu0 %v616
        %v693 = vpop.f32.mrf.mxu0
        %v694 = vadd.f32 0.0, %v693
        %v695 = vpop.f32.mrf.mxu0
        %696 = vdwg.mxu0
        %v698 = vsel %vm596, %v605, 0
        %v701 = vsel %vm596, %v606, 0
        %v704 = vsel %vm618, %v607, 0
        %706 = vmatprep.subr.mxu0 0.0
        %707 = vmatpush1.msra.mxu0 0.0
        %708 = vmatprep.subr.mxu0 0.0
        %709 = vmatpush1.msra.mxu0 0.0
        %710 = vmatprep.subr.mxu0 0.0
        %711 = vmatpush1.msra.mxu0 0.0
        %712 = vmatprep.subr.mxu0 0.0
        %713 = vmatpush1.msra.mxu0 0.0
        %714 = vmatprep.subr.mxu0 0.0
        %715 = vmatpush1.msra.mxu0 0.0
        %716 = vmatprep.subr.mxu0 0.0
        %717 = vmatpush1.msra.mxu0 0.0
        %718 = vmatprep.subr.mxu0 0.0
        %719 = vmatpush1.msra.mxu0 0.0
        %720 = vmatprep.subr.mxu0 0.0
        %721 = vmatpush1.msra.mxu0 0.0
        %722 = vmatprep.subr.mxu0 0.0
        %723 = vmatpush1.msra.mxu0 0.0
        %724 = vmatprep.subr.mxu0 0.0
        %725 = vmatpush1.msra.mxu0 0.0
        %726 = vmatprep.subr.mxu0 0.0
        %727 = vmatpush1.msra.mxu0 0.0
        %728 = vmatprep.subr.mxu0 0.0
        %729 = vmatpush1.msra.mxu0 0.0
        %730 = vmatprep.subr.mxu0 0.0
        %731 = vmatpush1.msra.mxu0 0.0
        %732 = vmatprep.subr.mxu0 0.0
        %733 = vmatpush1.msra.mxu0 0.0
        %734 = vmatprep.subr.mxu0 0.0
        %735 = vmatpush1.msra.mxu0 0.0
        %736 = vmatprep.subr.mxu0 0.0
        %737 = vmatpush1.msra.mxu0 %v704
        %738 = vmatprep.subr.mxu0 0.0
        %739 = vmatpush2.msra.mxu0 0.0
        %740 = vmatprep.subr.mxu0 0.0
        %741 = vmatpush2.msra.mxu0 0.0
        %742 = vmatprep.subr.mxu0 0.0
        %743 = vmatpush2.msra.mxu0 0.0
        %744 = vmatprep.subr.mxu0 0.0
        %745 = vmatpush2.msra.mxu0 0.0
        %746 = vmatprep.subr.mxu0 0.0
        %747 = vmatpush2.msra.mxu0 0.0
        %748 = vmatprep.subr.mxu0 0.0
        %749 = vmatpush2.msra.mxu0 0.0
        %750 = vmatprep.subr.mxu0 0.0
        %751 = vmatpush2.msra.mxu0 0.0
        %752 = vmatprep.subr.mxu0 0.0
        %753 = vmatpush2.msra.mxu0 0.0
        %754 = vmatprep.subr.mxu0 0.0
        %755 = vmatpush2.msra.mxu0 0.0
        %756 = vmatprep.subr.mxu0 0.0
        %757 = vmatpush2.msra.mxu0 0.0
        %758 = vmatprep.subr.mxu0 0.0
        %759 = vmatpush2.msra.mxu0 0.0
        %760 = vmatprep.subr.mxu0 0.0
        %761 = vmatpush2.msra.mxu0 0.0
        %762 = vmatprep.subr.mxu0 0.0
        %763 = vmatpush2.msra.mxu0 0.0
        %764 = vmatprep.subr.mxu0 0.0
        %765 = vmatpush2.msra.mxu0 0.0
        %766 = vmatprep.subr.mxu0 0.0
        %767 = vmatpush2.msra.mxu0 0.0
        %768 = vmatprep.subr.mxu0 0.0
        %769 = vmatpush2.msra.mxu0 0.0
        %770 = vmatprep.mubr.f32.mxu0 0.0
        %771 = vmatmul.mubr.f32.gmra.mxu0 %v698
        %v772 = vpop.f32.mrf.mxu0
        %v773 = vadd.f32 %v689, %v772
        %v774 = vpop.f32.mrf.mxu0
        %775 = vmatprep.mubr.f32.mxu0 0.0
        %776 = vmatmul.mubr.f32.gmra.mxu0 %v701
        %v777 = vpop.f32.mrf.mxu0
        %v778 = vadd.f32 %v694, %v777
        %v779 = vpop.f32.mrf.mxu0
        %780 = vdwg.mxu0
        %v781 = vld [vmem:[#allocation2 + $0x2] sm:$0xff]
        %v782 = vld [vmem:[#allocation2 + $0xa] sm:$0xff]
        %s783 = scalar_lea.vmem %s2, 8
        %v784 = vld [vmem:[%s783] sm:$0xf]
        %v786 = vsel %vm596, %v781, 0
        %v789 = vsel %vm596, %v782, 0
        %v792 = vsel %vm618, %v784, 0
        %794 = vmatprep.subr.mxu0 0.0
        %795 = vmatpush1.msra.mxu0 0.0
        %796 = vmatprep.subr.mxu0 0.0
        %797 = vmatpush1.msra.mxu0 0.0
        %798 = vmatprep.subr.mxu0 0.0
        %799 = vmatpush1.msra.mxu0 0.0
        %800 = vmatprep.subr.mxu0 0.0
        %801 = vmatpush1.msra.mxu0 0.0
        %802 = vmatprep.subr.mxu0 0.0
        %803 = vmatpush1.msra.mxu0 0.0
        %804 = vmatprep.subr.mxu0 0.0
        %805 = vmatpush1.msra.mxu0 0.0
        %806 = vmatprep.subr.mxu0 0.0
        %807 = vmatpush1.msra.mxu0 0.0
        %808 = vmatprep.subr.mxu0 0.0
        %809 = vmatpush1.msra.mxu0 0.0
        %810 = vmatprep.subr.mxu0 0.0
        %811 = vmatpush1.msra.mxu0 0.0
        %812 = vmatprep.subr.mxu0 0.0
        %813 = vmatpush1.msra.mxu0 0.0
        %814 = vmatprep.subr.mxu0 0.0
        %815 = vmatpush1.msra.mxu0 0.0
        %816 = vmatprep.subr.mxu0 0.0
        %817 = vmatpush1.msra.mxu0 0.0
        %818 = vmatprep.subr.mxu0 0.0
        %819 = vmatpush1.msra.mxu0 0.0
        %820 = vmatprep.subr.mxu0 0.0
        %821 = vmatpush1.msra.mxu0 0.0
        %822 = vmatprep.subr.mxu0 0.0
        %823 = vmatpush1.msra.mxu0 0.0
        %824 = vmatprep.subr.mxu0 0.0
        %825 = vmatpush1.msra.mxu0 %v792
        %826 = vmatprep.subr.mxu0 0.0
        %827 = vmatpush2.msra.mxu0 0.0
        %828 = vmatprep.subr.mxu0 0.0
        %829 = vmatpush2.msra.mxu0 0.0
        %830 = vmatprep.subr.mxu0 0.0
        %831 = vmatpush2.msra.mxu0 0.0
        %832 = vmatprep.subr.mxu0 0.0
        %833 = vmatpush2.msra.mxu0 0.0
        %834 = vmatprep.subr.mxu0 0.0
        %835 = vmatpush2.msra.mxu0 0.0
        %836 = vmatprep.subr.mxu0 0.0
        %837 = vmatpush2.msra.mxu0 0.0
        %838 = vmatprep.subr.mxu0 0.0
        %839 = vmatpush2.msra.mxu0 0.0
        %840 = vmatprep.subr.mxu0 0.0
        %841 = vmatpush2.msra.mxu0 0.0
        %842 = vmatprep.subr.mxu0 0.0
        %843 = vmatpush2.msra.mxu0 0.0
        %844 = vmatprep.subr.mxu0 0.0
        %845 = vmatpush2.msra.mxu0 0.0
        %846 = vmatprep.subr.mxu0 0.0
        %847 = vmatpush2.msra.mxu0 0.0
        %848 = vmatprep.subr.mxu0 0.0
        %849 = vmatpush2.msra.mxu0 0.0
        %850 = vmatprep.subr.mxu0 0.0
        %851 = vmatpush2.msra.mxu0 0.0
        %852 = vmatprep.subr.mxu0 0.0
        %853 = vmatpush2.msra.mxu0 0.0
        %854 = vmatprep.subr.mxu0 0.0
        %855 = vmatpush2.msra.mxu0 0.0
        %856 = vmatprep.subr.mxu0 0.0
        %857 = vmatpush2.msra.mxu0 0.0
        %858 = vmatprep.mubr.f32.mxu0 0.0
        %859 = vmatmul.mubr.f32.gmra.mxu0 %v786
        %v860 = vpop.f32.mrf.mxu0
        %v861 = vadd.f32 0.0, %v860
        %v862 = vpop.f32.mrf.mxu0
        %863 = vmatprep.mubr.f32.mxu0 0.0
        %864 = vmatmul.mubr.f32.gmra.mxu0 %v789
        %v865 = vpop.f32.mrf.mxu0
        %v866 = vadd.f32 0.0, %v865
        %v867 = vpop.f32.mrf.mxu0
        %868 = vdwg.mxu0
        %v869 = vadd.f32 %v773, %v861
        %v870 = vadd.f32 %v778, %v866
        %v871 = vld [vmem:[%s3] sm:$0x1]
        %v873 = vlaneseq
        %v874 = vshrl.u32 %v873, 7
        %v875 = vsub.s32 0, %v874
        %v876 = vrot.slane %v871, %v875
        %v878 = vadd.f32 %v869, %v876
        %v879 = vadd.f32 %v870, %v876
        %v880 = vmax.f32 %v878, 0.0
        %v881 = vmax.f32 %v879, 0.0
        %vm882 = vcmask 261120
        %883 = vst.msk [vmem:[#allocation3] sm:$0xff] %vm882, 0.0
        %884 = vst.msk [vmem:[#allocation3 + $0x8] sm:$0xff] %vm882, 0.0
        %vm885 = vcmask 254976
        %886 = vst.msk [vmem:[#allocation3 + $0x10] sm:$0x3] %vm885, 0.0
        %887 = vst.msk [vmem:[#allocation3 + $0x1] sm:$0xff] %vm882, %v880
        %888 = vst.msk [vmem:[#allocation3 + $0x9] sm:$0xff] %vm882, %v881
        %v889 = vld [vmem:[#allocation3] sm:$0xff]
        %v890 = vld [vmem:[#allocation3 + $0x8] sm:$0xff]
        %v891 = vld [vmem:[%s4] sm:$0xff]
        %v892 = vld [vmem:[%s4 + $0x8] sm:$0xff]
        %v893 = vld [vmem:[%s4 + $0x10] sm:$0xff]
        %v894 = vld [vmem:[%s4 + $0x18] sm:$0xff]
        %v895 = vld [vmem:[#allocation3 + $0x1] sm:$0xff]
        %v896 = vld [vmem:[#allocation3 + $0x9] sm:$0xff]
        %s897 = scalar_lea.vmem %s4, 32
        %v898 = vld [vmem:[%s897] sm:$0xff]
        %v899 = vld [vmem:[%s897 + $0x8] sm:$0xff]
        %v900 = vld [vmem:[%s897 + $0x10] sm:$0xff]
        %v901 = vld [vmem:[%s897 + $0x18] sm:$0xff]
        %v903 = vsel %vm882, %v895, 0
        %v906 = vsel %vm882, %v896, 0
        %908 = vmatprep.subr.mxu0 0.0
        %909 = vmatpush1.msra.mxu0 0.0
        %910 = vmatprep.subr.mxu0 0.0
        %911 = vmatpush1.msra.mxu0 0.0
        %912 = vmatprep.subr.mxu0 0.0
        %913 = vmatpush1.msra.mxu0 0.0
        %914 = vmatprep.subr.mxu0 0.0
        %915 = vmatpush1.msra.mxu0 0.0
        %916 = vmatprep.subr.mxu0 0.0
        %917 = vmatpush1.msra.mxu0 0.0
        %918 = vmatprep.subr.mxu0 0.0
        %919 = vmatpush1.msra.mxu0 0.0
        %920 = vmatprep.subr.mxu0 0.0
        %921 = vmatpush1.msra.mxu0 0.0
        %922 = vmatprep.subr.mxu0 0.0
        %923 = vmatpush1.msra.mxu0 0.0
        %924 = vmatprep.subr.mxu0 0.0
        %925 = vmatpush1.msra.mxu0 0.0
        %926 = vmatprep.subr.mxu0 0.0
        %927 = vmatpush1.msra.mxu0 0.0
        %928 = vmatprep.subr.mxu0 0.0
        %929 = vmatpush1.msra.mxu0 0.0
        %930 = vmatprep.subr.mxu0 0.0
        %931 = vmatpush1.msra.mxu0 0.0
        %932 = vmatprep.subr.mxu0 0.0
        %933 = vmatpush1.msra.mxu0 %v901
        %934 = vmatprep.subr.mxu0 0.0
        %935 = vmatpush1.msra.mxu0 %v900
        %936 = vmatprep.subr.mxu0 0.0
        %937 = vmatpush1.msra.mxu0 %v899
        %938 = vmatprep.subr.mxu0 0.0
        %939 = vmatpush1.msra.mxu0 %v898
        %940 = vmatprep.subr.mxu0 0.0
        %941 = vmatpush2.msra.mxu0 0.0
        %942 = vmatprep.subr.mxu0 0.0
        %943 = vmatpush2.msra.mxu0 0.0
        %944 = vmatprep.subr.mxu0 0.0
        %945 = vmatpush2.msra.mxu0 0.0
        %946 = vmatprep.subr.mxu0 0.0
        %947 = vmatpush2.msra.mxu0 0.0
        %948 = vmatprep.subr.mxu0 0.0
        %949 = vmatpush2.msra.mxu0 0.0
        %950 = vmatprep.subr.mxu0 0.0
        %951 = vmatpush2.msra.mxu0 0.0
        %952 = vmatprep.subr.mxu0 0.0
        %953 = vmatpush2.msra.mxu0 0.0
        %954 = vmatprep.subr.mxu0 0.0
        %955 = vmatpush2.msra.mxu0 0.0
        %956 = vmatprep.subr.mxu0 0.0
        %957 = vmatpush2.msra.mxu0 0.0
        %958 = vmatprep.subr.mxu0 0.0
        %959 = vmatpush2.msra.mxu0 0.0
        %960 = vmatprep.subr.mxu0 0.0
        %961 = vmatpush2.msra.mxu0 0.0
        %962 = vmatprep.subr.mxu0 0.0
        %963 = vmatpush2.msra.mxu0 0.0
        %964 = vmatprep.subr.mxu0 0.0
        %965 = vmatpush2.msra.mxu0 0.0
        %966 = vmatprep.subr.mxu0 0.0
        %967 = vmatpush2.msra.mxu0 0.0
        %968 = vmatprep.subr.mxu0 0.0
        %969 = vmatpush2.msra.mxu0 0.0
        %970 = vmatprep.subr.mxu0 0.0
        %971 = vmatpush2.msra.mxu0 0.0
        %972 = vmatprep.mubr.f32.mxu0 0.0
        %973 = vmatmul.mubr.f32.gmra.mxu0 %v903
        %v974 = vpop.f32.mrf.mxu0
        %v975 = vadd.f32 0.0, %v974
        %v976 = vpop.f32.mrf.mxu0
        %977 = vmatprep.mubr.f32.mxu0 0.0
        %978 = vmatmul.mubr.f32.gmra.mxu0 %v906
        %v979 = vpop.f32.mrf.mxu0
        %v980 = vadd.f32 0.0, %v979
        %v981 = vpop.f32.mrf.mxu0
        %982 = vdwg.mxu0
        %v984 = vsel %vm882, %v889, 0
        %v987 = vsel %vm882, %v890, 0
        %989 = vmatprep.subr.mxu0 0.0
        %990 = vmatpush1.msra.mxu0 0.0
        %991 = vmatprep.subr.mxu0 0.0
        %992 = vmatpush1.msra.mxu0 0.0
        %993 = vmatprep.subr.mxu0 0.0
        %994 = vmatpush1.msra.mxu0 0.0
        %995 = vmatprep.subr.mxu0 0.0
        %996 = vmatpush1.msra.mxu0 0.0
        %997 = vmatprep.subr.mxu0 0.0
        %998 = vmatpush1.msra.mxu0 0.0
        %999 = vmatprep.subr.mxu0 0.0
        %1000 = vmatpush1.msra.mxu0 0.0
        %1001 = vmatprep.subr.mxu0 0.0
        %1002 = vmatpush1.msra.mxu0 0.0
        %1003 = vmatprep.subr.mxu0 0.0
        %1004 = vmatpush1.msra.mxu0 0.0
        %1005 = vmatprep.subr.mxu0 0.0
        %1006 = vmatpush1.msra.mxu0 0.0
        %1007 = vmatprep.subr.mxu0 0.0
        %1008 = vmatpush1.msra.mxu0 0.0
        %1009 = vmatprep.subr.mxu0 0.0
        %1010 = vmatpush1.msra.mxu0 0.0
        %1011 = vmatprep.subr.mxu0 0.0
        %1012 = vmatpush1.msra.mxu0 0.0
        %1013 = vmatprep.subr.mxu0 0.0
        %1014 = vmatpush1.msra.mxu0 %v894
        %1015 = vmatprep.subr.mxu0 0.0
        %1016 = vmatpush1.msra.mxu0 %v893
        %1017 = vmatprep.subr.mxu0 0.0
        %1018 = vmatpush1.msra.mxu0 %v892
        %1019 = vmatprep.subr.mxu0 0.0
        %1020 = vmatpush1.msra.mxu0 %v891
        %1021 = vmatprep.subr.mxu0 0.0
        %1022 = vmatpush2.msra.mxu0 0.0
        %1023 = vmatprep.subr.mxu0 0.0
        %1024 = vmatpush2.msra.mxu0 0.0
        %1025 = vmatprep.subr.mxu0 0.0
        %1026 = vmatpush2.msra.mxu0 0.0
        %1027 = vmatprep.subr.mxu0 0.0
        %1028 = vmatpush2.msra.mxu0 0.0
        %1029 = vmatprep.subr.mxu0 0.0
        %1030 = vmatpush2.msra.mxu0 0.0
        %1031 = vmatprep.subr.mxu0 0.0
        %1032 = vmatpush2.msra.mxu0 0.0
        %1033 = vmatprep.subr.mxu0 0.0
        %1034 = vmatpush2.msra.mxu0 0.0
        %1035 = vmatprep.subr.mxu0 0.0
        %1036 = vmatpush2.msra.mxu0 0.0
        %1037 = vmatprep.subr.mxu0 0.0
        %1038 = vmatpush2.msra.mxu0 0.0
        %1039 = vmatprep.subr.mxu0 0.0
        %1040 = vmatpush2.msra.mxu0 0.0
        %1041 = vmatprep.subr.mxu0 0.0
        %1042 = vmatpush2.msra.mxu0 0.0
        %1043 = vmatprep.subr.mxu0 0.0
        %1044 = vmatpush2.msra.mxu0 0.0
        %1045 = vmatprep.subr.mxu0 0.0
        %1046 = vmatpush2.msra.mxu0 0.0
        %1047 = vmatprep.subr.mxu0 0.0
        %1048 = vmatpush2.msra.mxu0 0.0
        %1049 = vmatprep.subr.mxu0 0.0
        %1050 = vmatpush2.msra.mxu0 0.0
        %1051 = vmatprep.subr.mxu0 0.0
        %1052 = vmatpush2.msra.mxu0 0.0
        %1053 = vmatprep.mubr.f32.mxu0 0.0
        %1054 = vmatmul.mubr.f32.gmra.mxu0 %v984
        %v1055 = vpop.f32.mrf.mxu0
        %v1056 = vadd.f32 %v975, %v1055
        %v1057 = vpop.f32.mrf.mxu0
        %1058 = vmatprep.mubr.f32.mxu0 0.0
        %1059 = vmatmul.mubr.f32.gmra.mxu0 %v987
        %v1060 = vpop.f32.mrf.mxu0
        %v1061 = vadd.f32 %v980, %v1060
        %v1062 = vpop.f32.mrf.mxu0
        %1063 = vdwg.mxu0
        %v1064 = vld [vmem:[#allocation3 + $0x2] sm:$0xff]
        %v1065 = vld [vmem:[#allocation3 + $0xa] sm:$0xff]
        %s1066 = scalar_lea.vmem %s4, 64
        %v1067 = vld [vmem:[%s1066] sm:$0xff]
        %v1068 = vld [vmem:[%s1066 + $0x8] sm:$0xff]
        %v1069 = vld [vmem:[%s1066 + $0x10] sm:$0xff]
        %v1070 = vld [vmem:[%s1066 + $0x18] sm:$0xff]
        %v1072 = vsel %vm882, %v1064, 0
        %v1075 = vsel %vm882, %v1065, 0
        %1077 = vmatprep.subr.mxu0 0.0
        %1078 = vmatpush1.msra.mxu0 0.0
        %1079 = vmatprep.subr.mxu0 0.0
        %1080 = vmatpush1.msra.mxu0 0.0
        %1081 = vmatprep.subr.mxu0 0.0
        %1082 = vmatpush1.msra.mxu0 0.0
        %1083 = vmatprep.subr.mxu0 0.0
        %1084 = vmatpush1.msra.mxu0 0.0
        %1085 = vmatprep.subr.mxu0 0.0
        %1086 = vmatpush1.msra.mxu0 0.0
        %1087 = vmatprep.subr.mxu0 0.0
        %1088 = vmatpush1.msra.mxu0 0.0
        %1089 = vmatprep.subr.mxu0 0.0
        %1090 = vmatpush1.msra.mxu0 0.0
        %1091 = vmatprep.subr.mxu0 0.0
        %1092 = vmatpush1.msra.mxu0 0.0
        %1093 = vmatprep.subr.mxu0 0.0
        %1094 = vmatpush1.msra.mxu0 0.0
        %1095 = vmatprep.subr.mxu0 0.0
        %1096 = vmatpush1.msra.mxu0 0.0
        %1097 = vmatprep.subr.mxu0 0.0
        %1098 = vmatpush1.msra.mxu0 0.0
        %1099 = vmatprep.subr.mxu0 0.0
        %1100 = vmatpush1.msra.mxu0 0.0
        %1101 = vmatprep.subr.mxu0 0.0
        %1102 = vmatpush1.msra.mxu0 %v1070
        %1103 = vmatprep.subr.mxu0 0.0
        %1104 = vmatpush1.msra.mxu0 %v1069
        %1105 = vmatprep.subr.mxu0 0.0
        %1106 = vmatpush1.msra.mxu0 %v1068
        %1107 = vmatprep.subr.mxu0 0.0
        %1108 = vmatpush1.msra.mxu0 %v1067
        %1109 = vmatprep.subr.mxu0 0.0
        %1110 = vmatpush2.msra.mxu0 0.0
        %1111 = vmatprep.subr.mxu0 0.0
        %1112 = vmatpush2.msra.mxu0 0.0
        %1113 = vmatprep.subr.mxu0 0.0
        %1114 = vmatpush2.msra.mxu0 0.0
        %1115 = vmatprep.subr.mxu0 0.0
        %1116 = vmatpush2.msra.mxu0 0.0
        %1117 = vmatprep.subr.mxu0 0.0
        %1118 = vmatpush2.msra.mxu0 0.0
        %1119 = vmatprep.subr.mxu0 0.0
        %1120 = vmatpush2.msra.mxu0 0.0
        %1121 = vmatprep.subr.mxu0 0.0
        %1122 = vmatpush2.msra.mxu0 0.0
        %1123 = vmatprep.subr.mxu0 0.0
        %1124 = vmatpush2.msra.mxu0 0.0
        %1125 = vmatprep.subr.mxu0 0.0
        %1126 = vmatpush2.msra.mxu0 0.0
        %1127 = vmatprep.subr.mxu0 0.0
        %1128 = vmatpush2.msra.mxu0 0.0
        %1129 = vmatprep.subr.mxu0 0.0
        %1130 = vmatpush2.msra.mxu0 0.0
        %1131 = vmatprep.subr.mxu0 0.0
        %1132 = vmatpush2.msra.mxu0 0.0
        %1133 = vmatprep.subr.mxu0 0.0
        %1134 = vmatpush2.msra.mxu0 0.0
        %1135 = vmatprep.subr.mxu0 0.0
        %1136 = vmatpush2.msra.mxu0 0.0
        %1137 = vmatprep.subr.mxu0 0.0
        %1138 = vmatpush2.msra.mxu0 0.0
        %1139 = vmatprep.subr.mxu0 0.0
        %1140 = vmatpush2.msra.mxu0 0.0
        %1141 = vmatprep.mubr.f32.mxu0 0.0
        %1142 = vmatmul.mubr.f32.gmra.mxu0 %v1072
        %v1143 = vpop.f32.mrf.mxu0
        %v1144 = vadd.f32 0.0, %v1143
        %v1145 = vpop.f32.mrf.mxu0
        %1146 = vmatprep.mubr.f32.mxu0 0.0
        %1147 = vmatmul.mubr.f32.gmra.mxu0 %v1075
        %v1148 = vpop.f32.mrf.mxu0
        %v1149 = vadd.f32 0.0, %v1148
        %v1150 = vpop.f32.mrf.mxu0
        %1151 = vdwg.mxu0
        %v1152 = vadd.f32 %v1056, %v1144
        %v1153 = vadd.f32 %v1061, %v1149
        %v1154 = vld [vmem:[%s5] sm:$0x1]
        %v1156 = vlaneseq
        %v1157 = vshrl.u32 %v1156, 7
        %v1158 = vsub.s32 0, %v1157
        %v1159 = vrot.slane %v1154, %v1158
        %v1161 = vadd.f32 %v1152, %v1159
        %v1162 = vadd.f32 %v1153, %v1159
        %v1163 = vmax.f32 %v1161, 0.0
        %v1164 = vmax.f32 %v1162, 0.0
        %1165 = vst.msk [vmem:[#allocation4] sm:$0xff] %vm882, 0.0
        %1166 = vst.msk [vmem:[#allocation4 + $0x8] sm:$0xff] %vm882, 0.0
        %1167 = vst.msk [vmem:[#allocation4 + $0x10] sm:$0x3] %vm885, 0.0
        %1168 = vst.msk [vmem:[#allocation4 + $0x1] sm:$0xff] %vm882, %v1163
        %1169 = vst.msk [vmem:[#allocation4 + $0x9] sm:$0xff] %vm882, %v1164
        %v1170 = vld [vmem:[#allocation4] sm:$0xff]
        %v1171 = vld [vmem:[#allocation4 + $0x8] sm:$0xff]
        %v1172 = vld [vmem:[%s6] sm:$0xff]
        %v1173 = vld [vmem:[%s6 + $0x8] sm:$0xff]
        %v1174 = vld [vmem:[%s6 + $0x10] sm:$0xff]
        %v1175 = vld [vmem:[%s6 + $0x18] sm:$0xff]
        %v1176 = vld [vmem:[#allocation4 + $0x1] sm:$0xff]
        %v1177 = vld [vmem:[#allocation4 + $0x9] sm:$0xff]
        %s1178 = scalar_lea.vmem %s6, 32
        %v1179 = vld [vmem:[%s1178] sm:$0xff]
        %v1180 = vld [vmem:[%s1178 + $0x8] sm:$0xff]
        %v1181 = vld [vmem:[%s1178 + $0x10] sm:$0xff]
        %v1182 = vld [vmem:[%s1178 + $0x18] sm:$0xff]
        %v1184 = vsel %vm882, %v1176, 0
        %v1187 = vsel %vm882, %v1177, 0
        %1189 = vmatprep.subr.mxu0 0.0
        %1190 = vmatpush1.msra.mxu0 0.0
        %1191 = vmatprep.subr.mxu0 0.0
        %1192 = vmatpush1.msra.mxu0 0.0
        %1193 = vmatprep.subr.mxu0 0.0
        %1194 = vmatpush1.msra.mxu0 0.0
        %1195 = vmatprep.subr.mxu0 0.0
        %1196 = vmatpush1.msra.mxu0 0.0
        %1197 = vmatprep.subr.mxu0 0.0
        %1198 = vmatpush1.msra.mxu0 0.0
        %1199 = vmatprep.subr.mxu0 0.0
        %1200 = vmatpush1.msra.mxu0 0.0
        %1201 = vmatprep.subr.mxu0 0.0
        %1202 = vmatpush1.msra.mxu0 0.0
        %1203 = vmatprep.subr.mxu0 0.0
        %1204 = vmatpush1.msra.mxu0 0.0
        %1205 = vmatprep.subr.mxu0 0.0
        %1206 = vmatpush1.msra.mxu0 0.0
        %1207 = vmatprep.subr.mxu0 0.0
        %1208 = vmatpush1.msra.mxu0 0.0
        %1209 = vmatprep.subr.mxu0 0.0
        %1210 = vmatpush1.msra.mxu0 0.0
        %1211 = vmatprep.subr.mxu0 0.0
        %1212 = vmatpush1.msra.mxu0 0.0
        %1213 = vmatprep.subr.mxu0 0.0
        %1214 = vmatpush1.msra.mxu0 %v1182
        %1215 = vmatprep.subr.mxu0 0.0
        %1216 = vmatpush1.msra.mxu0 %v1181
        %1217 = vmatprep.subr.mxu0 0.0
        %1218 = vmatpush1.msra.mxu0 %v1180
        %1219 = vmatprep.subr.mxu0 0.0
        %1220 = vmatpush1.msra.mxu0 %v1179
        %1221 = vmatprep.subr.mxu0 0.0
        %1222 = vmatpush2.msra.mxu0 0.0
        %1223 = vmatprep.subr.mxu0 0.0
        %1224 = vmatpush2.msra.mxu0 0.0
        %1225 = vmatprep.subr.mxu0 0.0
        %1226 = vmatpush2.msra.mxu0 0.0
        %1227 = vmatprep.subr.mxu0 0.0
        %1228 = vmatpush2.msra.mxu0 0.0
        %1229 = vmatprep.subr.mxu0 0.0
        %1230 = vmatpush2.msra.mxu0 0.0
        %1231 = vmatprep.subr.mxu0 0.0
        %1232 = vmatpush2.msra.mxu0 0.0
        %1233 = vmatprep.subr.mxu0 0.0
        %1234 = vmatpush2.msra.mxu0 0.0
        %1235 = vmatprep.subr.mxu0 0.0
        %1236 = vmatpush2.msra.mxu0 0.0
        %1237 = vmatprep.subr.mxu0 0.0
        %1238 = vmatpush2.msra.mxu0 0.0
        %1239 = vmatprep.subr.mxu0 0.0
        %1240 = vmatpush2.msra.mxu0 0.0
        %1241 = vmatprep.subr.mxu0 0.0
        %1242 = vmatpush2.msra.mxu0 0.0
        %1243 = vmatprep.subr.mxu0 0.0
        %1244 = vmatpush2.msra.mxu0 0.0
        %1245 = vmatprep.subr.mxu0 0.0
        %1246 = vmatpush2.msra.mxu0 0.0
        %1247 = vmatprep.subr.mxu0 0.0
        %1248 = vmatpush2.msra.mxu0 0.0
        %1249 = vmatprep.subr.mxu0 0.0
        %1250 = vmatpush2.msra.mxu0 0.0
        %1251 = vmatprep.subr.mxu0 0.0
        %1252 = vmatpush2.msra.mxu0 0.0
        %1253 = vmatprep.mubr.f32.mxu0 0.0
        %1254 = vmatmul.mubr.f32.gmra.mxu0 %v1184
        %v1255 = vpop.f32.mrf.mxu0
        %v1256 = vadd.f32 0.0, %v1255
        %v1257 = vpop.f32.mrf.mxu0
        %1258 = vmatprep.mubr.f32.mxu0 0.0
        %1259 = vmatmul.mubr.f32.gmra.mxu0 %v1187
        %v1260 = vpop.f32.mrf.mxu0
        %v1261 = vadd.f32 0.0, %v1260
        %v1262 = vpop.f32.mrf.mxu0
        %1263 = vdwg.mxu0
        %v1265 = vsel %vm882, %v1170, 0
        %v1268 = vsel %vm882, %v1171, 0
        %1270 = vmatprep.subr.mxu0 0.0
        %1271 = vmatpush1.msra.mxu0 0.0
        %1272 = vmatprep.subr.mxu0 0.0
        %1273 = vmatpush1.msra.mxu0 0.0
        %1274 = vmatprep.subr.mxu0 0.0
        %1275 = vmatpush1.msra.mxu0 0.0
        %1276 = vmatprep.subr.mxu0 0.0
        %1277 = vmatpush1.msra.mxu0 0.0
        %1278 = vmatprep.subr.mxu0 0.0
        %1279 = vmatpush1.msra.mxu0 0.0
        %1280 = vmatprep.subr.mxu0 0.0
        %1281 = vmatpush1.msra.mxu0 0.0
        %1282 = vmatprep.subr.mxu0 0.0
        %1283 = vmatpush1.msra.mxu0 0.0
        %1284 = vmatprep.subr.mxu0 0.0
        %1285 = vmatpush1.msra.mxu0 0.0
        %1286 = vmatprep.subr.mxu0 0.0
        %1287 = vmatpush1.msra.mxu0 0.0
        %1288 = vmatprep.subr.mxu0 0.0
        %1289 = vmatpush1.msra.mxu0 0.0
        %1290 = vmatprep.subr.mxu0 0.0
        %1291 = vmatpush1.msra.mxu0 0.0
        %1292 = vmatprep.subr.mxu0 0.0
        %1293 = vmatpush1.msra.mxu0 0.0
        %1294 = vmatprep.subr.mxu0 0.0
        %1295 = vmatpush1.msra.mxu0 %v1175
        %1296 = vmatprep.subr.mxu0 0.0
        %1297 = vmatpush1.msra.mxu0 %v1174
        %1298 = vmatprep.subr.mxu0 0.0
        %1299 = vmatpush1.msra.mxu0 %v1173
        %1300 = vmatprep.subr.mxu0 0.0
        %1301 = vmatpush1.msra.mxu0 %v1172
        %1302 = vmatprep.subr.mxu0 0.0
        %1303 = vmatpush2.msra.mxu0 0.0
        %1304 = vmatprep.subr.mxu0 0.0
        %1305 = vmatpush2.msra.mxu0 0.0
        %1306 = vmatprep.subr.mxu0 0.0
        %1307 = vmatpush2.msra.mxu0 0.0
        %1308 = vmatprep.subr.mxu0 0.0
        %1309 = vmatpush2.msra.mxu0 0.0
        %1310 = vmatprep.subr.mxu0 0.0
        %1311 = vmatpush2.msra.mxu0 0.0
        %1312 = vmatprep.subr.mxu0 0.0
        %1313 = vmatpush2.msra.mxu0 0.0
        %1314 = vmatprep.subr.mxu0 0.0
        %1315 = vmatpush2.msra.mxu0 0.0
        %1316 = vmatprep.subr.mxu0 0.0
        %1317 = vmatpush2.msra.mxu0 0.0
        %1318 = vmatprep.subr.mxu0 0.0
        %1319 = vmatpush2.msra.mxu0 0.0
        %1320 = vmatprep.subr.mxu0 0.0
        %1321 = vmatpush2.msra.mxu0 0.0
        %1322 = vmatprep.subr.mxu0 0.0
        %1323 = vmatpush2.msra.mxu0 0.0
        %1324 = vmatprep.subr.mxu0 0.0
        %1325 = vmatpush2.msra.mxu0 0.0
        %1326 = vmatprep.subr.mxu0 0.0
        %1327 = vmatpush2.msra.mxu0 0.0
        %1328 = vmatprep.subr.mxu0 0.0
        %1329 = vmatpush2.msra.mxu0 0.0
        %1330 = vmatprep.subr.mxu0 0.0
        %1331 = vmatpush2.msra.mxu0 0.0
        %1332 = vmatprep.subr.mxu0 0.0
        %1333 = vmatpush2.msra.mxu0 0.0
        %1334 = vmatprep.mubr.f32.mxu0 0.0
        %1335 = vmatmul.mubr.f32.gmra.mxu0 %v1265
        %v1336 = vpop.f32.mrf.mxu0
        %v1337 = vadd.f32 %v1256, %v1336
        %v1338 = vpop.f32.mrf.mxu0
        %1339 = vmatprep.mubr.f32.mxu0 0.0
        %1340 = vmatmul.mubr.f32.gmra.mxu0 %v1268
        %v1341 = vpop.f32.mrf.mxu0
        %v1342 = vadd.f32 %v1261, %v1341
        %v1343 = vpop.f32.mrf.mxu0
        %1344 = vdwg.mxu0
        %v1345 = vld [vmem:[#allocation4 + $0x2] sm:$0xff]
        %v1346 = vld [vmem:[#allocation4 + $0xa] sm:$0xff]
        %s1347 = scalar_lea.vmem %s6, 64
        %v1348 = vld [vmem:[%s1347] sm:$0xff]
        %v1349 = vld [vmem:[%s1347 + $0x8] sm:$0xff]
        %v1350 = vld [vmem:[%s1347 + $0x10] sm:$0xff]
        %v1351 = vld [vmem:[%s1347 + $0x18] sm:$0xff]
        %v1353 = vsel %vm882, %v1345, 0
        %v1356 = vsel %vm882, %v1346, 0
        %1358 = vmatprep.subr.mxu0 0.0
        %1359 = vmatpush1.msra.mxu0 0.0
        %1360 = vmatprep.subr.mxu0 0.0
        %1361 = vmatpush1.msra.mxu0 0.0
        %1362 = vmatprep.subr.mxu0 0.0
        %1363 = vmatpush1.msra.mxu0 0.0
        %1364 = vmatprep.subr.mxu0 0.0
        %1365 = vmatpush1.msra.mxu0 0.0
        %1366 = vmatprep.subr.mxu0 0.0
        %1367 = vmatpush1.msra.mxu0 0.0
        %1368 = vmatprep.subr.mxu0 0.0
        %1369 = vmatpush1.msra.mxu0 0.0
        %1370 = vmatprep.subr.mxu0 0.0
        %1371 = vmatpush1.msra.mxu0 0.0
        %1372 = vmatprep.subr.mxu0 0.0
        %1373 = vmatpush1.msra.mxu0 0.0
        %1374 = vmatprep.subr.mxu0 0.0
        %1375 = vmatpush1.msra.mxu0 0.0
        %1376 = vmatprep.subr.mxu0 0.0
        %1377 = vmatpush1.msra.mxu0 0.0
        %1378 = vmatprep.subr.mxu0 0.0
        %1379 = vmatpush1.msra.mxu0 0.0
        %1380 = vmatprep.subr.mxu0 0.0
        %1381 = vmatpush1.msra.mxu0 0.0
        %1382 = vmatprep.subr.mxu0 0.0
        %1383 = vmatpush1.msra.mxu0 %v1351
        %1384 = vmatprep.subr.mxu0 0.0
        %1385 = vmatpush1.msra.mxu0 %v1350
        %1386 = vmatprep.subr.mxu0 0.0
        %1387 = vmatpush1.msra.mxu0 %v1349
        %1388 = vmatprep.subr.mxu0 0.0
        %1389 = vmatpush1.msra.mxu0 %v1348
        %1390 = vmatprep.subr.mxu0 0.0
        %1391 = vmatpush2.msra.mxu0 0.0
        %1392 = vmatprep.subr.mxu0 0.0
        %1393 = vmatpush2.msra.mxu0 0.0
        %1394 = vmatprep.subr.mxu0 0.0
        %1395 = vmatpush2.msra.mxu0 0.0
        %1396 = vmatprep.subr.mxu0 0.0
        %1397 = vmatpush2.msra.mxu0 0.0
        %1398 = vmatprep.subr.mxu0 0.0
        %1399 = vmatpush2.msra.mxu0 0.0
        %1400 = vmatprep.subr.mxu0 0.0
        %1401 = vmatpush2.msra.mxu0 0.0
        %1402 = vmatprep.subr.mxu0 0.0
        %1403 = vmatpush2.msra.mxu0 0.0
        %1404 = vmatprep.subr.mxu0 0.0
        %1405 = vmatpush2.msra.mxu0 0.0
        %1406 = vmatprep.subr.mxu0 0.0
        %1407 = vmatpush2.msra.mxu0 0.0
        %1408 = vmatprep.subr.mxu0 0.0
        %1409 = vmatpush2.msra.mxu0 0.0
        %1410 = vmatprep.subr.mxu0 0.0
        %1411 = vmatpush2.msra.mxu0 0.0
        %1412 = vmatprep.subr.mxu0 0.0
        %1413 = vmatpush2.msra.mxu0 0.0
        %1414 = vmatprep.subr.mxu0 0.0
        %1415 = vmatpush2.msra.mxu0 0.0
        %1416 = vmatprep.subr.mxu0 0.0
        %1417 = vmatpush2.msra.mxu0 0.0
        %1418 = vmatprep.subr.mxu0 0.0
        %1419 = vmatpush2.msra.mxu0 0.0
        %1420 = vmatprep.subr.mxu0 0.0
        %1421 = vmatpush2.msra.mxu0 0.0
        %1422 = vmatprep.mubr.f32.mxu0 0.0
        %1423 = vmatmul.mubr.f32.gmra.mxu0 %v1353
        %v1424 = vpop.f32.mrf.mxu0
        %v1425 = vadd.f32 0.0, %v1424
        %v1426 = vpop.f32.mrf.mxu0
        %1427 = vmatprep.mubr.f32.mxu0 0.0
        %1428 = vmatmul.mubr.f32.gmra.mxu0 %v1356
        %v1429 = vpop.f32.mrf.mxu0
        %v1430 = vadd.f32 0.0, %v1429
        %v1431 = vpop.f32.mrf.mxu0
        %1432 = vdwg.mxu0
        %v1433 = vadd.f32 %v1337, %v1425
        %v1434 = vadd.f32 %v1342, %v1430
        %v1435 = vld [vmem:[%s7] sm:$0x1]
        %v1437 = vlaneseq
        %v1438 = vshrl.u32 %v1437, 7
        %v1439 = vsub.s32 0, %v1438
        %v1440 = vrot.slane %v1435, %v1439
        %v1442 = vadd.f32 %v1433, %v1440
        %v1443 = vadd.f32 %v1434, %v1440
        %v1444 = vadd.f32 %v1442, %v880
        %v1445 = vadd.f32 %v1443, %v881
        %v1446 = vmax.f32 %v1444, 0.0
        %v1447 = vmax.f32 %v1445, 0.0
        %v1448 = vsel %vm882, %v1446, 0.0
        %v1449 = vsel %vm882, %v1447, 0.0
        %v1450 = vadd.f32 %v1448, %v1449
        %v1451 = vrot.slane %v1450, 4
        %v1452 = vadd.f32 %v1450, %v1451
        %v1453 = vrot.slane %v1452, 2
        %v1454 = vadd.f32 %v1452, %v1453
        %v1455 = vrot.slane %v1454, 1
        %v1456 = vadd.f32 %v1454, %v1455
        %v1457 = vmul.f32 %v1456, 0.0625
        %v1458 = vld [vmem:[%s8] sm:$0xff]
        %v1459 = vld [vmem:[%s8 + $0x8] sm:$0xff]
        %v1460 = vld [vmem:[%s8 + $0x10] sm:$0xff]
        %v1461 = vld [vmem:[%s8 + $0x18] sm:$0xff]
        %v1462 = vld [vmem:[%s9] sm:$0x1]
        %v1464 = vsel %vm882, %v1457, 0
        %1466 = vmatprep.subr.mxu0 0.0
        %1467 = vmatpush1.msra.mxu0 0.0
        %1468 = vmatprep.subr.mxu0 0.0
        %1469 = vmatpush1.msra.mxu0 0.0
        %1470 = vmatprep.subr.mxu0 0.0
        %1471 = vmatpush1.msra.mxu0 0.0
        %1472 = vmatprep.subr.mxu0 0.0
        %1473 = vmatpush1.msra.mxu0 0.0
        %1474 = vmatprep.subr.mxu0 0.0
        %1475 = vmatpush1.msra.mxu0 0.0
        %1476 = vmatprep.subr.mxu0 0.0
        %1477 = vmatpush1.msra.mxu0 0.0
        %1478 = vmatprep.subr.mxu0 0.0
        %1479 = vmatpush1.msra.mxu0 0.0
        %1480 = vmatprep.subr.mxu0 0.0
        %1481 = vmatpush1.msra.mxu0 0.0
        %1482 = vmatprep.subr.mxu0 0.0
        %1483 = vmatpush1.msra.mxu0 0.0
        %1484 = vmatprep.subr.mxu0 0.0
        %1485 = vmatpush1.msra.mxu0 0.0
        %1486 = vmatprep.subr.mxu0 0.0
        %1487 = vmatpush1.msra.mxu0 0.0
        %1488 = vmatprep.subr.mxu0 0.0
        %1489 = vmatpush1.msra.mxu0 0.0
        %1490 = vmatprep.subr.mxu0 0.0
        %1491 = vmatpush1.msra.mxu0 %v1461
        %1492 = vmatprep.subr.mxu0 0.0
        %1493 = vmatpush1.msra.mxu0 %v1460
        %1494 = vmatprep.subr.mxu0 0.0
        %1495 = vmatpush1.msra.mxu0 %v1459
        %1496 = vmatprep.subr.mxu0 0.0
        %1497 = vmatpush1.msra.mxu0 %v1458
        %1498 = vmatprep.subr.mxu0 0.0
        %1499 = vmatpush2.msra.mxu0 0.0
        %1500 = vmatprep.subr.mxu0 0.0
        %1501 = vmatpush2.msra.mxu0 0.0
        %1502 = vmatprep.subr.mxu0 0.0
        %1503 = vmatpush2.msra.mxu0 0.0
        %1504 = vmatprep.subr.mxu0 0.0
        %1505 = vmatpush2.msra.mxu0 0.0
        %1506 = vmatprep.subr.mxu0 0.0
        %1507 = vmatpush2.msra.mxu0 0.0
        %1508 = vmatprep.subr.mxu0 0.0
        %1509 = vmatpush2.msra.mxu0 0.0
        %1510 = vmatprep.subr.mxu0 0.0
        %1511 = vmatpush2.msra.mxu0 0.0
        %1512 = vmatprep.subr.mxu0 0.0
        %1513 = vmatpush2.msra.mxu0 0.0
        %1514 = vmatprep.subr.mxu0 0.0
        %1515 = vmatpush2.msra.mxu0 0.0
        %1516 = vmatprep.subr.mxu0 0.0
        %1517 = vmatpush2.msra.mxu0 0.0
        %1518 = vmatprep.subr.mxu0 0.0
        %1519 = vmatpush2.msra.mxu0 0.0
        %1520 = vmatprep.subr.mxu0 0.0
        %1521 = vmatpush2.msra.mxu0 0.0
        %1522 = vmatprep.subr.mxu0 0.0
        %1523 = vmatpush2.msra.mxu0 0.0
        %1524 = vmatprep.subr.mxu0 0.0
        %1525 = vmatpush2.msra.mxu0 0.0
        %1526 = vmatprep.subr.mxu0 0.0
        %1527 = vmatpush2.msra.mxu0 0.0
        %1528 = vmatprep.subr.mxu0 0.0
        %1529 = vmatpush2.msra.mxu0 0.0
        %1530 = vmatprep.mubr.f32.mxu0 0.0
        %1531 = vmatmul.mubr.f32.gmra.mxu0 %v1464
        %v1532 = vpop.f32.mrf.mxu0
        %v1533 = vadd.f32 %v1462, %v1532
        %v1534 = vpop.f32.mrf.mxu0
        %1535 = vdwg.mxu0
        %v1536 = vld [vmem:[%s592] sm:$0x1]
        %v1537 = vld [vmem:[%s10] sm:$0x3]
        %v1538 = vld [vmem:[%s11] sm:$0xff]
        %vm1539 = vcmask 64512
        %v1541 = vsel %vm1539, %v1533, 0
        %1543 = vmatprep.subr.mxu0 0.0
        %1544 = vmatpush1.msra.mxu0 0.0
        %1545 = vmatprep.subr.mxu0 0.0
        %1546 = vmatpush1.msra.mxu0 0.0
        %1547 = vmatprep.subr.mxu0 0.0
        %1548 = vmatpush1.msra.mxu0 0.0
        %1549 = vmatprep.subr.mxu0 0.0
        %1550 = vmatpush1.msra.mxu0 0.0
        %1551 = vmatprep.subr.mxu0 0.0
        %1552 = vmatpush1.msra.mxu0 0.0
        %1553 = vmatprep.subr.mxu0 0.0
        %1554 = vmatpush1.msra.mxu0 0.0
        %1555 = vmatprep.subr.mxu0 0.0
        %1556 = vmatpush1.msra.mxu0 0.0
        %1557 = vmatprep.subr.mxu0 0.0
        %1558 = vmatpush1.msra.mxu0 0.0
        %1559 = vmatprep.subr.mxu0 0.0
        %1560 = vmatpush1.msra.mxu0 0.0
        %1561 = vmatprep.subr.mxu0 0.0
        %1562 = vmatpush1.msra.mxu0 0.0
        %1563 = vmatprep.subr.mxu0 0.0
        %1564 = vmatpush1.msra.mxu0 0.0
        %1565 = vmatprep.subr.mxu0 0.0
        %1566 = vmatpush1.msra.mxu0 0.0
        %1567 = vmatprep.subr.mxu0 0.0
        %1568 = vmatpush1.msra.mxu0 0.0
        %1569 = vmatprep.subr.mxu0 0.0
        %1570 = vmatpush1.msra.mxu0 0.0
        %1571 = vmatprep.subr.mxu0 0.0
        %1572 = vmatpush1.msra.mxu0 0.0
        %1573 = vmatprep.subr.mxu0 0.0
        %1574 = vmatpush1.msra.mxu0 %v1538
        %1575 = vmatprep.subr.mxu0 0.0
        %1576 = vmatpush2.msra.mxu0 0.0
        %1577 = vmatprep.subr.mxu0 0.0
        %1578 = vmatpush2.msra.mxu0 0.0
        %1579 = vmatprep.subr.mxu0 0.0
        %1580 = vmatpush2.msra.mxu0 0.0
        %1581 = vmatprep.subr.mxu0 0.0
        %1582 = vmatpush2.msra.mxu0 0.0
        %1583 = vmatprep.subr.mxu0 0.0
        %1584 = vmatpush2.msra.mxu0 0.0
        %1585 = vmatprep.subr.mxu0 0.0
        %1586 = vmatpush2.msra.mxu0 0.0
        %1587 = vmatprep.subr.mxu0 0.0
        %1588 = vmatpush2.msra.mxu0 0.0
        %1589 = vmatprep.subr.mxu0 0.0
        %1590 = vmatpush2.msra.mxu0 0.0
        %1591 = vmatprep.subr.mxu0 0.0
        %1592 = vmatpush2.msra.mxu0 0.0
        %1593 = vmatprep.subr.mxu0 0.0
        %1594 = vmatpush2.msra.mxu0 0.0
        %1595 = vmatprep.subr.mxu0 0.0
        %1596 = vmatpush2.msra.mxu0 0.0
        %1597 = vmatprep.subr.mxu0 0.0
        %1598 = vmatpush2.msra.mxu0 0.0
        %1599 = vmatprep.subr.mxu0 0.0
        %1600 = vmatpush2.msra.mxu0 0.0
        %1601 = vmatprep.subr.mxu0 0.0
        %1602 = vmatpush2.msra.mxu0 0.0
        %1603 = vmatprep.subr.mxu0 0.0
        %1604 = vmatpush2.msra.mxu0 0.0
        %1605 = vmatprep.subr.mxu0 0.0
        %1606 = vmatpush2.msra.mxu0 0.0
        %1607 = vmatprep.mubr.f32.mxu0 0.0
        %1608 = vmatmul.mubr.f32.gmra.mxu0 %v1541
        %v1609 = vpop.f32.mrf.mxu0
        %v1610 = vadd.f32 0.0, %v1609
        %v1611 = vpop.f32.mrf.mxu0
        %1612 = vdwg.mxu0
        %vm1613 = vcmask 15360
        %v1615 = vsel %vm1613, %v1536, 0
        %vm1617 = vcmask 1041408
        %v1619 = vsel %vm1617, %v1537, 0
        %1621 = vmatprep.subr.mxu0 0.0
        %1622 = vmatpush1.msra.mxu0 0.0
        %1623 = vmatprep.subr.mxu0 0.0
        %1624 = vmatpush1.msra.mxu0 0.0
        %1625 = vmatprep.subr.mxu0 0.0
        %1626 = vmatpush1.msra.mxu0 0.0
        %1627 = vmatprep.subr.mxu0 0.0
        %1628 = vmatpush1.msra.mxu0 0.0
        %1629 = vmatprep.subr.mxu0 0.0
        %1630 = vmatpush1.msra.mxu0 0.0
        %1631 = vmatprep.subr.mxu0 0.0
        %1632 = vmatpush1.msra.mxu0 0.0
        %1633 = vmatprep.subr.mxu0 0.0
        %1634 = vmatpush1.msra.mxu0 0.0
        %1635 = vmatprep.subr.mxu0 0.0
        %1636 = vmatpush1.msra.mxu0 0.0
        %1637 = vmatprep.subr.mxu0 0.0
        %1638 = vmatpush1.msra.mxu0 0.0
        %1639 = vmatprep.subr.mxu0 0.0
        %1640 = vmatpush1.msra.mxu0 0.0
        %1641 = vmatprep.subr.mxu0 0.0
        %1642 = vmatpush1.msra.mxu0 0.0
        %1643 = vmatprep.subr.mxu0 0.0
        %1644 = vmatpush1.msra.mxu0 0.0
        %1645 = vmatprep.subr.mxu0 0.0
        %1646 = vmatpush1.msra.mxu0 0.0
        %1647 = vmatprep.subr.mxu0 0.0
        %1648 = vmatpush1.msra.mxu0 0.0
        %1649 = vmatprep.subr.mxu0 0.0
        %1650 = vmatpush1.msra.mxu0 0.0
        %1651 = vmatprep.subr.mxu0 0.0
        %1652 = vmatpush1.msra.mxu0 %v1619
        %1653 = vmatprep.subr.mxu0 0.0
        %1654 = vmatpush2.msra.mxu0 0.0
        %1655 = vmatprep.subr.mxu0 0.0
        %1656 = vmatpush2.msra.mxu0 0.0
        %1657 = vmatprep.subr.mxu0 0.0
        %1658 = vmatpush2.msra.mxu0 0.0
        %1659 = vmatprep.subr.mxu0 0.0
        %1660 = vmatpush2.msra.mxu0 0.0
        %1661 = vmatprep.subr.mxu0 0.0
        %1662 = vmatpush2.msra.mxu0 0.0
        %1663 = vmatprep.subr.mxu0 0.0
        %1664 = vmatpush2.msra.mxu0 0.0
        %1665 = vmatprep.subr.mxu0 0.0
        %1666 = vmatpush2.msra.mxu0 0.0
        %1667 = vmatprep.subr.mxu0 0.0
        %1668 = vmatpush2.msra.mxu0 0.0
        %1669 = vmatprep.subr.mxu0 0.0
        %1670 = vmatpush2.msra.mxu0 0.0
        %1671 = vmatprep.subr.mxu0 0.0
        %1672 = vmatpush2.msra.mxu0 0.0
        %1673 = vmatprep.subr.mxu0 0.0
        %1674 = vmatpush2.msra.mxu0 0.0
        %1675 = vmatprep.subr.mxu0 0.0
        %1676 = vmatpush2.msra.mxu0 0.0
        %1677 = vmatprep.subr.mxu0 0.0
        %1678 = vmatpush2.msra.mxu0 0.0
        %1679 = vmatprep.subr.mxu0 0.0
        %1680 = vmatpush2.msra.mxu0 0.0
        %1681 = vmatprep.subr.mxu0 0.0
        %1682 = vmatpush2.msra.mxu0 0.0
        %1683 = vmatprep.subr.mxu0 0.0
        %1684 = vmatpush2.msra.mxu0 0.0
        %1685 = vmatprep.mubr.f32.mxu0 0.0
        %1686 = vmatmul.mubr.f32.gmra.mxu0 %v1615
        %v1687 = vpop.f32.mrf.mxu0
        %v1688 = vadd.f32 %v1610, %v1687
        %v1689 = vpop.f32.mrf.mxu0
        %1690 = vdwg.mxu0
        %v1691 = vld [vmem:[%s12] sm:$0x1]
        %v1692 = vadd.f32 %v1688, %v1691
        %v1693 = vmax.f32 %v1692, 0.0
        %v1694 = vld [vmem:[%s13] sm:$0xff]
        %v1695 = vld [vmem:[%s13 + $0x8] sm:$0xff]
        %v1696 = vld [vmem:[%s13 + $0x10] sm:$0xff]
        %v1697 = vld [vmem:[%s13 + $0x18] sm:$0xff]
        %v1698 = vld [vmem:[%s14] sm:$0x1]
        %v1700 = vsel %vm882, %v1693, 0
        %1702 = vmatprep.subr.mxu0 0.0
        %1703 = vmatpush1.msra.mxu0 0.0
        %1704 = vmatprep.subr.mxu0 0.0
        %1705 = vmatpush1.msra.mxu0 0.0
        %1706 = vmatprep.subr.mxu0 0.0
        %1707 = vmatpush1.msra.mxu0 0.0
        %1708 = vmatprep.subr.mxu0 0.0
        %1709 = vmatpush1.msra.mxu0 0.0
        %1710 = vmatprep.subr.mxu0 0.0
        %1711 = vmatpush1.msra.mxu0 0.0
        %1712 = vmatprep.subr.mxu0 0.0
        %1713 = vmatpush1.msra.mxu0 0.0
        %1714 = vmatprep.subr.mxu0 0.0
        %1715 = vmatpush1.msra.mxu0 0.0
        %1716 = vmatprep.subr.mxu0 0.0
        %1717 = vmatpush1.msra.mxu0 0.0
        %1718 = vmatprep.subr.mxu0 0.0
        %1719 = vmatpush1.msra.mxu0 0.0
        %1720 = vmatprep.subr.mxu0 0.0
        %1721 = vmatpush1.msra.mxu0 0.0
        %1722 = vmatprep.subr.mxu0 0.0
        %1723 = vmatpush1.msra.mxu0 0.0
        %1724 = vmatprep.subr.mxu0 0.0
        %1725 = vmatpush1.msra.mxu0 0.0
        %1726 = vmatprep.subr.mxu0 0.0
        %1727 = vmatpush1.msra.mxu0 %v1697
        %1728 = vmatprep.subr.mxu0 0.0
        %1729 = vmatpush1.msra.mxu0 %v1696
        %1730 = vmatprep.subr.mxu0 0.0
        %1731 = vmatpush1.msra.mxu0 %v1695
        %1732 = vmatprep.subr.mxu0 0.0
        %1733 = vmatpush1.msra.mxu0 %v1694
        %1734 = vmatprep.subr.mxu0 0.0
        %1735 = vmatpush2.msra.mxu0 0.0
        %1736 = vmatprep.subr.mxu0 0.0
        %1737 = vmatpush2.msra.mxu0 0.0
        %1738 = vmatprep.subr.mxu0 0.0
        %1739 = vmatpush2.msra.mxu0 0.0
        %1740 = vmatprep.subr.mxu0 0.0
        %1741 = vmatpush2.msra.mxu0 0.0
        %1742 = vmatprep.subr.mxu0 0.0
        %1743 = vmatpush2.msra.mxu0 0.0
        %1744 = vmatprep.subr.mxu0 0.0
        %1745 = vmatpush2.msra.mxu0 0.0
        %1746 = vmatprep.subr.mxu0 0.0
        %1747 = vmatpush2.msra.mxu0 0.0
        %1748 = vmatprep.subr.mxu0 0.0
        %1749 = vmatpush2.msra.mxu0 0.0
        %1750 = vmatprep.subr.mxu0 0.0
        %1751 = vmatpush2.msra.mxu0 0.0
        %1752 = vmatprep.subr.mxu0 0.0
        %1753 = vmatpush2.msra.mxu0 0.0
        %1754 = vmatprep.subr.mxu0 0.0
        %1755 = vmatpush2.msra.mxu0 0.0
        %1756 = vmatprep.subr.mxu0 0.0
        %1757 = vmatpush2.msra.mxu0 0.0
        %1758 = vmatprep.subr.mxu0 0.0
        %1759 = vmatpush2.msra.mxu0 0.0
        %1760 = vmatprep.subr.mxu0 0.0
        %1761 = vmatpush2.msra.mxu0 0.0
        %1762 = vmatprep.subr.mxu0 0.0
        %1763 = vmatpush2.msra.mxu0 0.0
        %1764 = vmatprep.subr.mxu0 0.0
        %1765 = vmatpush2.msra.mxu0 0.0
        %1766 = vmatprep.mubr.f32.mxu0 0.0
        %1767 = vmatmul.mubr.f32.gmra.mxu0 %v1700
        %v1768 = vpop.f32.mrf.mxu0
        %v1769 = vadd.f32 %v1698, %v1768
        %v1770 = vpop.f32.mrf.mxu0
        %1771 = vdwg.mxu0
        %v1772 = vtanh.pop %v1769
        %v1773 = vld [vmem:[%s15] sm:$0xff]
        %v1774 = vld [vmem:[%s15 + $0x8] sm:$0xff]
        %v1775 = vld [vmem:[%s15 + $0x10] sm:$0xff]
        %v1776 = vld [vmem:[%s15 + $0x18] sm:$0xff]
        %v1777 = vld [vmem:[%s16] sm:$0x1]
        %1778 = vmatprep.subr.mxu0 0.0
        %1779 = vmatpush1.msra.mxu0 0.0
        %1780 = vmatprep.subr.mxu0 0.0
        %1781 = vmatpush1.msra.mxu0 0.0
        %1782 = vmatprep.subr.mxu0 0.0
        %1783 = vmatpush1.msra.mxu0 0.0
        %1784 = vmatprep.subr.mxu0 0.0
        %1785 = vmatpush1.msra.mxu0 0.0
        %1786 = vmatprep.subr.mxu0 0.0
        %1787 = vmatpush1.msra.mxu0 0.0
        %1788 = vmatprep.subr.mxu0 0.0
        %1789 = vmatpush1.msra.mxu0 0.0
        %1790 = vmatprep.subr.mxu0 0.0
        %1791 = vmatpush1.msra.mxu0 0.0
        %1792 = vmatprep.subr.mxu0 0.0
        %1793 = vmatpush1.msra.mxu0 0.0
        %1794 = vmatprep.subr.mxu0 0.0
        %1795 = vmatpush1.msra.mxu0 0.0
        %1796 = vmatprep.subr.mxu0 0.0
        %1797 = vmatpush1.msra.mxu0 0.0
        %1798 = vmatprep.subr.mxu0 0.0
        %1799 = vmatpush1.msra.mxu0 0.0
        %1800 = vmatprep.subr.mxu0 0.0
        %1801 = vmatpush1.msra.mxu0 0.0
        %1802 = vmatprep.subr.mxu0 0.0
        %1803 = vmatpush1.msra.mxu0 %v1776
        %1804 = vmatprep.subr.mxu0 0.0
        %1805 = vmatpush1.msra.mxu0 %v1775
        %1806 = vmatprep.subr.mxu0 0.0
        %1807 = vmatpush1.msra.mxu0 %v1774
        %1808 = vmatprep.subr.mxu0 0.0
        %1809 = vmatpush1.msra.mxu0 %v1773
        %1810 = vmatprep.subr.mxu0 0.0
        %1811 = vmatpush2.msra.mxu0 0.0
        %1812 = vmatprep.subr.mxu0 0.0
        %1813 = vmatpush2.msra.mxu0 0.0
        %1814 = vmatprep.subr.mxu0 0.0
        %1815 = vmatpush2.msra.mxu0 0.0
        %1816 = vmatprep.subr.mxu0 0.0
        %1817 = vmatpush2.msra.mxu0 0.0
        %1818 = vmatprep.subr.mxu0 0.0
        %1819 = vmatpush2.msra.mxu0 0.0
        %1820 = vmatprep.subr.mxu0 0.0
        %1821 = vmatpush2.msra.mxu0 0.0
        %1822 = vmatprep.subr.mxu0 0.0
        %1823 = vmatpush2.msra.mxu0 0.0
        %1824 = vmatprep.subr.mxu0 0.0
        %1825 = vmatpush2.msra.mxu0 0.0
        %1826 = vmatprep.subr.mxu0 0.0
        %1827 = vmatpush2.msra.mxu0 0.0
        %1828 = vmatprep.subr.mxu0 0.0
        %1829 = vmatpush2.msra.mxu0 0.0
        %1830 = vmatprep.subr.mxu0 0.0
        %1831 = vmatpush2.msra.mxu0 0.0
        %1832 = vmatprep.subr.mxu0 0.0
        %1833 = vmatpush2.msra.mxu0 0.0
        %1834 = vmatprep.subr.mxu0 0.0
        %1835 = vmatpush2.msra.mxu0 0.0
        %1836 = vmatprep.subr.mxu0 0.0
        %1837 = vmatpush2.msra.mxu0 0.0
        %1838 = vmatprep.subr.mxu0 0.0
        %1839 = vmatpush2.msra.mxu0 0.0
        %1840 = vmatprep.subr.mxu0 0.0
        %1841 = vmatpush2.msra.mxu0 0.0
        %1842 = vmatprep.mubr.f32.mxu0 0.0
        %1843 = vmatmul.mubr.f32.gmra.mxu0 %v1700
        %v1844 = vpop.f32.mrf.mxu0
        %v1845 = vadd.f32 %v1777, %v1844
        %v1846 = vpop.f32.mrf.mxu0
        %1847 = vdwg.mxu0
        %v1848 = vmul.f32 %v1772, 1.442695
        %v1849 = vpow.pop %v1848
        %v1852 = vunpack.c.l.s4 1966171168
        %v1853 = vunpack.c.0.s8 %v1852
        %v1854 = vlaneseq
        %v1855 = vshrl.u32 %v1854, 7
        %v1856 = vsub.s32 %v1853, %v1855
        %v1857 = vrot.slane %v1849, %v1856
        %v1859 = vunpack.c.l.s4 1966171168
        %v1860 = vunpack.c.0.s8 %v1859
        %v1861 = vlaneseq
        %v1862 = vshrl.u32 %v1861, 7
        %v1863 = vsub.s32 %v1860, %v1862
        %v1864 = vrot.slane %v1857, %v1863
        %1865 = vrot.lane.b32.xlu0 %v1864, 2
        %v1866 = vpop.permute.xlu0 %1865
        %v1868 = vmul.f32 %v1536, %v1866
        %v1871 = vunpack.c.l.s4 1966171168
        %v1872 = vunpack.c.0.s8 %v1871
        %v1873 = vlaneseq
        %v1874 = vshrl.u32 %v1873, 7
        %v1875 = vsub.s32 %v1872, %v1874
        %v1876 = vrot.slane %v1845, %v1875
        %v1878 = vunpack.c.l.s4 1966171168
        %v1879 = vunpack.c.0.s8 %v1878
        %v1880 = vlaneseq
        %v1881 = vshrl.u32 %v1880, 7
        %v1882 = vsub.s32 %v1879, %v1881
        %v1883 = vrot.slane %v1876, %v1882
        %1884 = vrot.lane.b32.xlu0 %v1883, 2
        %v1885 = vpop.permute.xlu0 %1884
        %v1887 = vadd.f32 %v1868, %v1885
        %vm1888 = vcmask 8192
        %v1889 = vsel %vm1888, %v1772, 0.0
        %1890 = vadd.xlane.f32.xlu0 %v1889
        %v1891 = vpop.xlane.xlu0 %1890
        %v1892 = vadd.f32 %v1891, 0.0
        %s1893 = scalar_lea.vmem %s10, 2
        %v1894 = vld [vmem:[%s1893] sm:$0x3]
        %s1895 = scalar_lea.vmem %s11, 8
        %v1896 = vld [vmem:[%s1895] sm:$0xff]
        %1897 = vmatprep.subr.mxu0 0.0
        %1898 = vmatpush1.msra.mxu0 0.0
        %1899 = vmatprep.subr.mxu0 0.0
        %1900 = vmatpush1.msra.mxu0 0.0
        %1901 = vmatprep.subr.mxu0 0.0
        %1902 = vmatpush1.msra.mxu0 0.0
        %1903 = vmatprep.subr.mxu0 0.0
        %1904 = vmatpush1.msra.mxu0 0.0
        %1905 = vmatprep.subr.mxu0 0.0
        %1906 = vmatpush1.msra.mxu0 0.0
        %1907 = vmatprep.subr.mxu0 0.0
        %1908 = vmatpush1.msra.mxu0 0.0
        %1909 = vmatprep.subr.mxu0 0.0
        %1910 = vmatpush1.msra.mxu0 0.0
        %1911 = vmatprep.subr.mxu0 0.0
        %1912 = vmatpush1.msra.mxu0 0.0
        %1913 = vmatprep.subr.mxu0 0.0
        %1914 = vmatpush1.msra.mxu0 0.0
        %1915 = vmatprep.subr.mxu0 0.0
        %1916 = vmatpush1.msra.mxu0 0.0
        %1917 = vmatprep.subr.mxu0 0.0
        %1918 = vmatpush1.msra.mxu0 0.0
        %1919 = vmatprep.subr.mxu0 0.0
        %1920 = vmatpush1.msra.mxu0 0.0
        %1921 = vmatprep.subr.mxu0 0.0
        %1922 = vmatpush1.msra.mxu0 0.0
        %1923 = vmatprep.subr.mxu0 0.0
        %1924 = vmatpush1.msra.mxu0 0.0
        %1925 = vmatprep.subr.mxu0 0.0
        %1926 = vmatpush1.msra.mxu0 0.0
        %1927 = vmatprep.subr.mxu0 0.0
        %1928 = vmatpush1.msra.mxu0 %v1896
        %1929 = vmatprep.subr.mxu0 0.0
        %1930 = vmatpush2.msra.mxu0 0.0
        %1931 = vmatprep.subr.mxu0 0.0
        %1932 = vmatpush2.msra.mxu0 0.0
        %1933 = vmatprep.subr.mxu0 0.0
        %1934 = vmatpush2.msra.mxu0 0.0
        %1935 = vmatprep.subr.mxu0 0.0
        %1936 = vmatpush2.msra.mxu0 0.0
        %1937 = vmatprep.subr.mxu0 0.0
        %1938 = vmatpush2.msra.mxu0 0.0
        %1939 = vmatprep.subr.mxu0 0.0
        %1940 = vmatpush2.msra.mxu0 0.0
        %1941 = vmatprep.subr.mxu0 0.0
        %1942 = vmatpush2.msra.mxu0 0.0
        %1943 = vmatprep.subr.mxu0 0.0
        %1944 = vmatpush2.msra.mxu0 0.0
        %1945 = vmatprep.subr.mxu0 0.0
        %1946 = vmatpush2.msra.mxu0 0.0
        %1947 = vmatprep.subr.mxu0 0.0
        %1948 = vmatpush2.msra.mxu0 0.0
        %1949 = vmatprep.subr.mxu0 0.0
        %1950 = vmatpush2.msra.mxu0 0.0
        %1951 = vmatprep.subr.mxu0 0.0
        %1952 = vmatpush2.msra.mxu0 0.0
        %1953 = vmatprep.subr.mxu0 0.0
        %1954 = vmatpush2.msra.mxu0 0.0
        %1955 = vmatprep.subr.mxu0 0.0
        %1956 = vmatpush2.msra.mxu0 0.0
        %1957 = vmatprep.subr.mxu0 0.0
        %1958 = vmatpush2.msra.mxu0 0.0
        %1959 = vmatprep.subr.mxu0 0.0
        %1960 = vmatpush2.msra.mxu0 0.0
        %1961 = vmatprep.mubr.f32.mxu0 0.0
        %1962 = vmatmul.mubr.f32.gmra.mxu0 %v1541
        %v1963 = vpop.f32.mrf.mxu0
        %v1964 = vadd.f32 0.0, %v1963
        %v1965 = vpop.f32.mrf.mxu0
        %1966 = vdwg.mxu0
        %v1968 = vlaneseq
        %v1969 = vshrl.u32 %v1968, 7
        %v1970 = vsub.s32 0, %v1969
        %v1971 = vrot.slane %v1887, %v1970
        %1972 = vrot.lane.b32.xlu0 %v1971, 126
        %v1973 = vpop.permute.xlu0 %1972
        %v1974 = vsel %vm1613, %v1973, 0
        %v1977 = vsel %vm1617, %v1894, 0
        %1979 = vmatprep.subr.mxu0 0.0
        %1980 = vmatpush1.msra.mxu0 0.0
        %1981 = vmatprep.subr.mxu0 0.0
        %1982 = vmatpush1.msra.mxu0 0.0
        %1983 = vmatprep.subr.mxu0 0.0
        %1984 = vmatpush1.msra.mxu0 0.0
        %1985 = vmatprep.subr.mxu0 0.0
        %1986 = vmatpush1.msra.mxu0 0.0
        %1987 = vmatprep.subr.mxu0 0.0
        %1988 = vmatpush1.msra.mxu0 0.0
        %1989 = vmatprep.subr.mxu0 0.0
        %1990 = vmatpush1.msra.mxu0 0.0
        %1991 = vmatprep.subr.mxu0 0.0
        %1992 = vmatpush1.msra.mxu0 0.0
        %1993 = vmatprep.subr.mxu0 0.0
        %1994 = vmatpush1.msra.mxu0 0.0
        %1995 = vmatprep.subr.mxu0 0.0
        %1996 = vmatpush1.msra.mxu0 0.0
        %1997 = vmatprep.subr.mxu0 0.0
        %1998 = vmatpush1.msra.mxu0 0.0
        %1999 = vmatprep.subr.mxu0 0.0
        %2000 = vmatpush1.msra.mxu0 0.0
        %2001 = vmatprep.subr.mxu0 0.0
        %2002 = vmatpush1.msra.mxu0 0.0
        %2003 = vmatprep.subr.mxu0 0.0
        %2004 = vmatpush1.msra.mxu0 0.0
        %2005 = vmatprep.subr.mxu0 0.0
        %2006 = vmatpush1.msra.mxu0 0.0
        %2007 = vmatprep.subr.mxu0 0.0
        %2008 = vmatpush1.msra.mxu0 0.0
        %2009 = vmatprep.subr.mxu0 0.0
        %2010 = vmatpush1.msra.mxu0 %v1977
        %2011 = vmatprep.subr.mxu0 0.0
        %2012 = vmatpush2.msra.mxu0 0.0
        %2013 = vmatprep.subr.mxu0 0.0
        %2014 = vmatpush2.msra.mxu0 0.0
        %2015 = vmatprep.subr.mxu0 0.0
        %2016 = vmatpush2.msra.mxu0 0.0
        %2017 = vmatprep.subr.mxu0 0.0
        %2018 = vmatpush2.msra.mxu0 0.0
        %2019 = vmatprep.subr.mxu0 0.0
        %2020 = vmatpush2.msra.mxu0 0.0
        %2021 = vmatprep.subr.mxu0 0.0
        %2022 = vmatpush2.msra.mxu0 0.0
        %2023 = vmatprep.subr.mxu0 0.0
        %2024 = vmatpush2.msra.mxu0 0.0
        %2025 = vmatprep.subr.mxu0 0.0
        %2026 = vmatpush2.msra.mxu0 0.0
        %2027 = vmatprep.subr.mxu0 0.0
        %2028 = vmatpush2.msra.mxu0 0.0
        %2029 = vmatprep.subr.mxu0 0.0
        %2030 = vmatpush2.msra.mxu0 0.0
        %2031 = vmatprep.subr.mxu0 0.0
        %2032 = vmatpush2.msra.mxu0 0.0
        %2033 = vmatprep.subr.mxu0 0.0
        %2034 = vmatpush2.msra.mxu0 0.0
        %2035 = vmatprep.subr.mxu0 0.0
        %2036 = vmatpush2.msra.mxu0 0.0
        %2037 = vmatprep.subr.mxu0 0.0
        %2038 = vmatpush2.msra.mxu0 0.0
        %2039 = vmatprep.subr.mxu0 0.0
        %2040 = vmatpush2.msra.mxu0 0.0
        %2041 = vmatprep.subr.mxu0 0.0
        %2042 = vmatpush2.msra.mxu0 0.0
        %2043 = vmatprep.mubr.f32.mxu0 0.0
        %2044 = vmatmul.mubr.f32.gmra.mxu0 %v1974
        %v2045 = vpop.f32.mrf.mxu0
        %v2046 = vadd.f32 %v1964, %v2045
        %v2047 = vpop.f32.mrf.mxu0
        %2048 = vdwg.mxu0
        %s2049 = scalar_lea.vmem %s12, 1
        %v2050 = vld [vmem:[%s2049] sm:$0x1]
        %v2051 = vadd.f32 %v2046, %v2050
        %v2052 = vmax.f32 %v2051, 0.0
        %s2053 = scalar_lea.vmem %s13, 32
        %v2054 = vld [vmem:[%s2053] sm:$0xff]
        %v2055 = vld [vmem:[%s2053 + $0x8] sm:$0xff]
        %v2056 = vld [vmem:[%s2053 + $0x10] sm:$0xff]
        %v2057 = vld [vmem:[%s2053 + $0x18] sm:$0xff]
        %s2058 = scalar_lea.vmem %s14, 1
        %v2059 = vld [vmem:[%s2058] sm:$0x1]
        %v2061 = vsel %vm882, %v2052, 0
        %2063 = vmatprep.subr.mxu0 0.0
        %2064 = vmatpush1.msra.mxu0 0.0
        %2065 = vmatprep.subr.mxu0 0.0
        %2066 = vmatpush1.msra.mxu0 0.0
        %2067 = vmatprep.subr.mxu0 0.0
        %2068 = vmatpush1.msra.mxu0 0.0
        %2069 = vmatprep.subr.mxu0 0.0
        %2070 = vmatpush1.msra.mxu0 0.0
        %2071 = vmatprep.subr.mxu0 0.0
        %2072 = vmatpush1.msra.mxu0 0.0
        %2073 = vmatprep.subr.mxu0 0.0
        %2074 = vmatpush1.msra.mxu0 0.0
        %2075 = vmatprep.subr.mxu0 0.0
        %2076 = vmatpush1.msra.mxu0 0.0
        %2077 = vmatprep.subr.mxu0 0.0
        %2078 = vmatpush1.msra.mxu0 0.0
        %2079 = vmatprep.subr.mxu0 0.0
        %2080 = vmatpush1.msra.mxu0 0.0
        %2081 = vmatprep.subr.mxu0 0.0
        %2082 = vmatpush1.msra.mxu0 0.0
        %2083 = vmatprep.subr.mxu0 0.0
        %2084 = vmatpush1.msra.mxu0 0.0
        %2085 = vmatprep.subr.mxu0 0.0
        %2086 = vmatpush1.msra.mxu0 0.0
        %2087 = vmatprep.subr.mxu0 0.0
        %2088 = vmatpush1.msra.mxu0 %v2057
        %2089 = vmatprep.subr.mxu0 0.0
        %2090 = vmatpush1.msra.mxu0 %v2056
        %2091 = vmatprep.subr.mxu0 0.0
        %2092 = vmatpush1.msra.mxu0 %v2055
        %2093 = vmatprep.subr.mxu0 0.0
        %2094 = vmatpush1.msra.mxu0 %v2054
        %2095 = vmatprep.subr.mxu0 0.0
        %2096 = vmatpush2.msra.mxu0 0.0
        %2097 = vmatprep.subr.mxu0 0.0
        %2098 = vmatpush2.msra.mxu0 0.0
        %2099 = vmatprep.subr.mxu0 0.0
        %2100 = vmatpush2.msra.mxu0 0.0
        %2101 = vmatprep.subr.mxu0 0.0
        %2102 = vmatpush2.msra.mxu0 0.0
        %2103 = vmatprep.subr.mxu0 0.0
        %2104 = vmatpush2.msra.mxu0 0.0
        %2105 = vmatprep.subr.mxu0 0.0
        %2106 = vmatpush2.msra.mxu0 0.0
        %2107 = vmatprep.subr.mxu0 0.0
        %2108 = vmatpush2.msra.mxu0 0.0
        %2109 = vmatprep.subr.mxu0 0.0
        %2110 = vmatpush2.msra.mxu0 0.0
        %2111 = vmatprep.subr.mxu0 0.0
        %2112 = vmatpush2.msra.mxu0 0.0
        %2113 = vmatprep.subr.mxu0 0.0
        %2114 = vmatpush2.msra.mxu0 0.0
        %2115 = vmatprep.subr.mxu0 0.0
        %2116 = vmatpush2.msra.mxu0 0.0
        %2117 = vmatprep.subr.mxu0 0.0
        %2118 = vmatpush2.msra.mxu0 0.0
        %2119 = vmatprep.subr.mxu0 0.0
        %2120 = vmatpush2.msra.mxu0 0.0
        %2121 = vmatprep.subr.mxu0 0.0
        %2122 = vmatpush2.msra.mxu0 0.0
        %2123 = vmatprep.subr.mxu0 0.0
        %2124 = vmatpush2.msra.mxu0 0.0
        %2125 = vmatprep.subr.mxu0 0.0
        %2126 = vmatpush2.msra.mxu0 0.0
        %2127 = vmatprep.mubr.f32.mxu0 0.0
        %2128 = vmatmul.mubr.f32.gmra.mxu0 %v2061
        %v2129 = vpop.f32.mrf.mxu0
        %v2130 = vadd.f32 %v2059, %v2129
        %v2131 = vpop.f32.mrf.mxu0
        %2132 = vdwg.mxu0
        %v2133 = vtanh.pop %v2130
        %s2134 = scalar_lea.vmem %s15, 32
        %v2135 = vld [vmem:[%s2134] sm:$0xff]
        %v2136 = vld [vmem:[%s2134 + $0x8] sm:$0xff]
        %v2137 = vld [vmem:[%s2134 + $0x10] sm:$0xff]
        %v2138 = vld [vmem:[%s2134 + $0x18] sm:$0xff]
        %s2139 = scalar_lea.vmem %s16, 1
        %v2140 = vld [vmem:[%s2139] sm:$0x1]
        %2141 = vmatprep.subr.mxu0 0.0
        %2142 = vmatpush1.msra.mxu0 0.0
        %2143 = vmatprep.subr.mxu0 0.0
        %2144 = vmatpush1.msra.mxu0 0.0
        %2145 = vmatprep.subr.mxu0 0.0
        %2146 = vmatpush1.msra.mxu0 0.0
        %2147 = vmatprep.subr.mxu0 0.0
        %2148 = vmatpush1.msra.mxu0 0.0
        %2149 = vmatprep.subr.mxu0 0.0
        %2150 = vmatpush1.msra.mxu0 0.0
        %2151 = vmatprep.subr.mxu0 0.0
        %2152 = vmatpush1.msra.mxu0 0.0
        %2153 = vmatprep.subr.mxu0 0.0
        %2154 = vmatpush1.msra.mxu0 0.0
        %2155 = vmatprep.subr.mxu0 0.0
        %2156 = vmatpush1.msra.mxu0 0.0
        %2157 = vmatprep.subr.mxu0 0.0
        %2158 = vmatpush1.msra.mxu0 0.0
        %2159 = vmatprep.subr.mxu0 0.0
        %2160 = vmatpush1.msra.mxu0 0.0
        %2161 = vmatprep.subr.mxu0 0.0
        %2162 = vmatpush1.msra.mxu0 0.0
        %2163 = vmatprep.subr.mxu0 0.0
        %2164 = vmatpush1.msra.mxu0 0.0
        %2165 = vmatprep.subr.mxu0 0.0
        %2166 = vmatpush1.msra.mxu0 %v2138
        %2167 = vmatprep.subr.mxu0 0.0
        %2168 = vmatpush1.msra.mxu0 %v2137
        %2169 = vmatprep.subr.mxu0 0.0
        %2170 = vmatpush1.msra.mxu0 %v2136
        %2171 = vmatprep.subr.mxu0 0.0
        %2172 = vmatpush1.msra.mxu0 %v2135
        %2173 = vmatprep.subr.mxu0 0.0
        %2174 = vmatpush2.msra.mxu0 0.0
        %2175 = vmatprep.subr.mxu0 0.0
        %2176 = vmatpush2.msra.mxu0 0.0
        %2177 = vmatprep.subr.mxu0 0.0
        %2178 = vmatpush2.msra.mxu0 0.0
        %2179 = vmatprep.subr.mxu0 0.0
        %2180 = vmatpush2.msra.mxu0 0.0
        %2181 = vmatprep.subr.mxu0 0.0
        %2182 = vmatpush2.msra.mxu0 0.0
        %2183 = vmatprep.subr.mxu0 0.0
        %2184 = vmatpush2.msra.mxu0 0.0
        %2185 = vmatprep.subr.mxu0 0.0
        %2186 = vmatpush2.msra.mxu0 0.0
        %2187 = vmatprep.subr.mxu0 0.0
        %2188 = vmatpush2.msra.mxu0 0.0
        %2189 = vmatprep.subr.mxu0 0.0
        %2190 = vmatpush2.msra.mxu0 0.0
        %2191 = vmatprep.subr.mxu0 0.0
        %2192 = vmatpush2.msra.mxu0 0.0
        %2193 = vmatprep.subr.mxu0 0.0
        %2194 = vmatpush2.msra.mxu0 0.0
        %2195 = vmatprep.subr.mxu0 0.0
        %2196 = vmatpush2.msra.mxu0 0.0
        %2197 = vmatprep.subr.mxu0 0.0
        %2198 = vmatpush2.msra.mxu0 0.0
        %2199 = vmatprep.subr.mxu0 0.0
        %2200 = vmatpush2.msra.mxu0 0.0
        %2201 = vmatprep.subr.mxu0 0.0
        %2202 = vmatpush2.msra.mxu0 0.0
        %2203 = vmatprep.subr.mxu0 0.0
        %2204 = vmatpush2.msra.mxu0 0.0
        %2205 = vmatprep.mubr.f32.mxu0 0.0
        %2206 = vmatmul.mubr.f32.gmra.mxu0 %v2061
        %v2207 = vpop.f32.mrf.mxu0
        %v2208 = vadd.f32 %v2140, %v2207
        %v2209 = vpop.f32.mrf.mxu0
        %2210 = vdwg.mxu0
        %v2211 = vmul.f32 %v2133, 1.442695
        %v2212 = vpow.pop %v2211
        %v2213 = vmul.f32 %v1536, %v2212
        %v2214 = vadd.f32 %v2213, %v2208
        %v2215 = vsel %vm1888, %v2133, 0.0
        %2216 = vadd.xlane.f32.xlu0 %v2215
        %v2217 = vpop.xlane.xlu0 %2216
        %v2218 = vadd.f32 %v1892, %v2217
        %v2221 = vlaneseq
        %v2222 = vshrl.u32 %v2221, 7
        %v2223 = vsub.s32 0, %v2222
        %v2224 = vrot.slane %v2214, %v2223
        %2225 = vrot.lane.b32.xlu0 %v2224, 2
        %v2226 = vpop.permute.xlu0 %2225
        %v2228 = vsel %vm1613, %v1973, %v2226
        %vm2229 = vcmask 24576
        %2230 = vst.msk [vmem:[%s579] sm:$0x1] %vm2229, %v2228
        %vm2231 = vcmask 0
        %2232 = vst.msk [vmem:[%s595] sm:$0x1] %vm2231, %v2218
        %s2233 = sand.u32 %s408, 1
        %s2234 = scalar_lea.sflag [#allocation6], %s2233
        %s2235 = sand.u32 %s408, 1
        %s2236 = scalar_lea.vmem [#allocation5], %s2235
        %p2237 = scmp.lt.s32.totalorder %s33, 1
        %s2238 = scalar_select %p2237, %s33, 1
        %s2239 = scalar_lea.vmem %s18, %s2238
        // Predicated region
        $region89: #{glas_forward.1} parent=87 // pred_check
          %p2240 = pneg %p418
        $region90: #{glas_forward.1} parent=87 // pred_check_branch
          %2242 = sbr.rel (%p2240) target = $region92
        $region91: #{glas_forward.1} parent=87 // pred_region
          %s2244 = ssub.s32 16, 16
          %2245 = vsyncadd %s2234, %s2244
          %s2246 = smul.addr %s33, 16
          %s2247 = scalar_lea.hbm %s17, %s2246
          %s2249 = sshll.u32 %s2236, 4
          %s2250 = int_to_ptr.vmem [resolvable:$true] %s2249
          %2252 = dma.vmem_to_hbm [thread:$0]  %s2250, 16, %s2247, %s2234
        $region92: #{glas_forward.1} parent=87 // pred_fallthru
          _
        // Predicated region
        $region93: #{glas_forward.1} parent=87 // pred_check
          %p2253 = pneg %p444
        $region94: #{glas_forward.1} parent=87 // pred_check_branch
          %2255 = sbr.rel (%p2253) target = $region96
        $region95: #{glas_forward.1} parent=87 // pred_region
          _
        $region96: #{glas_forward.1} parent=87 // pred_fallthru
          _
      $region88: #{glas_forward.1} parent=5 // pred_fallthru
        _
      %p2256 = scmp.le.s32.totalorder 2, %s28
      // Predicated region
      $region97: #{glas_forward.1} parent=5 // pred_check
        %p2257 = pneg %p2256
      $region98: #{glas_forward.1} parent=5 // pred_check_branch
        %2259 = sbr.rel (%p2257) target = $region100
      $region99: #{glas_forward.1} parent=5 // pred_region
        %s2260 = ssub.s32 %s28, 2
        // Predicated region
        $region101: #{glas_forward.1} parent=99 // pred_check
          %p2261 = pneg %p424
        $region102: #{glas_forward.1} parent=99 // pred_check_branch
          %2263 = sbr.rel (%p2261) target = $region104
        $region103: #{glas_forward.1} parent=99 // pred_region
          %s2264 = sand.u32 %s409, 1
          %s2265 = scalar_lea.sflag [#allocation6], %s2264
          %s2266 = sand.u32 %s409, 1
          %s2267 = scalar_lea.vmem [#allocation5], %s2266
          %2268 = dma.done %s2265, 16
        $region104: #{glas_forward.1} parent=99 // pred_fallthru
          _
        // Predicated region
        $region105: #{glas_forward.1} parent=99 // pred_check
          %p2269 = pneg %p450
        $region106: #{glas_forward.1} parent=99 // pred_check_branch
          %2271 = sbr.rel (%p2269) target = $region108
        $region107: #{glas_forward.1} parent=99 // pred_region
          %p2272 = scmp.lt.s32.totalorder %s34, 1
          %s2273 = scalar_select %p2272, %s34, 1
          %s2274 = scalar_lea.vmem %s18, %s2273
        $region108: #{glas_forward.1} parent=99 // pred_fallthru
          _
      $region100: #{glas_forward.1} parent=5 // pred_fallthru
        _
    $region6: #{glas_forward.1} parent=1 // loop_footer
      %s32 = sadd.s32 1, %s28
    $region7: #{glas_forward.1} parent=1 // loop_footer_branch
      %27 = sbr.rel target = $region3
    $region8: #{glas_forward.1} parent=1 // loop_exit
      _
    %2275 = vsyncpa [#allocation6], 1
    %s2276 = scalar_lea.sflag [#allocation6], 1
    %2277 = vsyncpa %s2276, 1

</llo_original>
